<compile_context>
chip_gen: v7x
topology: tpu7x:2x2x1
jax: 0.10.0
libtpu: 0.0.40
codegen_flags: <defaults>
</compile_context>

<pallas_src>
import functools

import jax
import jax.numpy as jnp
from jax.experimental import pallas as pl
from jax.experimental.pallas import tpu as pltpu


# ---------------------------------------------------------------------------
# Pallas kernels
# ---------------------------------------------------------------------------
def _conv_relu_pool_kernel(p_ref, w_ref, b_ref, o_ref):
    """Fused conv + bias + ReLU + 2x2 maxpool for one image.

    p_ref: (1, 4, Kp, P) bf16   -- 4 pool taps of transposed im2col patches
    w_ref: (Co, Kp)       bf16  -- flattened conv weights (PyTorch (c, kh, kw) order), K-padded
    b_ref: (Co, 1)        f32
    o_ref: (1, Co, P)     f32   -- pooled output, P = Ho2*Wo2 (lane-dense last dim)
    """
    w = w_ref[...]
    acc = jnp.dot(w, p_ref[0, 0], preferred_element_type=jnp.float32)
    for t in range(1, 4):  # static unroll over the 4 pool-window taps
        acc = jnp.maximum(
            acc, jnp.dot(w, p_ref[0, t], preferred_element_type=jnp.float32))
    o_ref[0] = jnp.maximum(acc + b_ref[...], 0.0).astype(o_ref.dtype)


def _mlp_kernel(x_ref, w1_ref, b1_ref, w2_ref, b2_ref, w3_ref, b3_ref, o_ref):
    """Fused fc1(+ReLU) -> fc2(+ReLU) -> fc3; intermediates never leave VMEM."""
    h = jnp.dot(x_ref[...], w1_ref[...], preferred_element_type=jnp.float32)
    h = jnp.maximum(h + b1_ref[...], 0.0)
    h = jnp.dot(h.astype(jnp.bfloat16), w2_ref[...],
                preferred_element_type=jnp.float32)
    h = jnp.maximum(h + b2_ref[...], 0.0)
    h = jnp.dot(h.astype(jnp.bfloat16), w3_ref[...],
                preferred_element_type=jnp.float32)
    o_ref[...] = (h + b3_ref[...]).astype(o_ref.dtype)


_COMPILER_PARAMS = pltpu.CompilerParams(
    dimension_semantics=("parallel",),
    vmem_limit_bytes=32 * 1024 * 1024,
)


# ---------------------------------------------------------------------------
# Host-side glue
# ---------------------------------------------------------------------------
def _pool_patches(x_nchw, k, kpad):
    """Build transposed, pool-tap-grouped im2col patches.

    x_nchw: (B, C, H, W) f32  ->  (B, 4, Kp, Ho2*Wo2) bf16
    K-flatten order is (c, kh, kw), matching PyTorch weight.reshape(out_c, -1).
    """
    B, C, H, W = x_nchw.shape
    Ho, Wo = H - k + 1, W - k + 1
    Ho2, Wo2 = Ho // 2, Wo // 2
    taps = jnp.stack(
        [x_nchw[:, :, i:i + Ho, j:j + Wo] for i in range(k) for j in range(k)],
        axis=2)                                        # (B, C, kk, Ho, Wo)
    taps = taps.reshape(B, C, k * k, Ho2, 2, Wo2, 2)   # (B, C, kk, ph, dh, pw, dw)
    taps = taps.transpose(0, 4, 6, 1, 2, 3, 5)         # (B, dh, dw, C, kk, ph, pw)
    patches = taps.reshape(B, 4, C * k * k, Ho2 * Wo2)
    if kpad > C * k * k:
        patches = jnp.pad(
            patches, ((0, 0), (0, 0), (0, kpad - C * k * k), (0, 0)))
    return patches.astype(jnp.bfloat16), Ho2, Wo2


def conv_relu_pool(x_nchw, w_mat, bias_col, k):
    """x: (B, C, H, W) f32, w_mat: (Co, Kp) bf16, bias_col: (Co, 1) f32
    -> (B, Co, Ho2, Wo2) f32 (NCHW)."""
    B = x_nchw.shape[0]
    Co, Kp = w_mat.shape
    patches, Ho2, Wo2 = _pool_patches(x_nchw, k, Kp)
    P = Ho2 * Wo2
    out = pl.pallas_call(
        _conv_relu_pool_kernel,
        out_shape=jax.ShapeDtypeStruct((B, Co, P), jnp.float32),
        grid=(B,),
        in_specs=[
            pl.BlockSpec((1, 4, Kp, P), lambda b: (b, 0, 0, 0)),
            pl.BlockSpec((Co, Kp), lambda b: (0, 0)),
            pl.BlockSpec((Co, 1), lambda b: (0, 0)),
        ],
        out_specs=pl.BlockSpec((1, Co, P), lambda b: (b, 0, 0)),
        compiler_params=_COMPILER_PARAMS,
    )(patches, w_mat, bias_col)
    return out.reshape(B, Co, Ho2, Wo2)


def mlp_head(x, w1, b1, w2, b2, w3, b3):
    """x: (B, 400) bf16 -> logits (B, 10) f32; one fused pallas_call."""
    B, K = x.shape
    N_out = w3.shape[1]
    tb = B if B <= 256 else 256
    out = pl.pallas_call(
        _mlp_kernel,
        out_shape=jax.ShapeDtypeStruct((B, N_out), jnp.float32),
        grid=(pl.cdiv(B, tb),),
        in_specs=[
            pl.BlockSpec((tb, K), lambda i: (i, 0)),
            pl.BlockSpec(w1.shape, lambda i: (0, 0)),
            pl.BlockSpec(b1.shape, lambda i: (0, 0)),
            pl.BlockSpec(w2.shape, lambda i: (0, 0)),
            pl.BlockSpec(b2.shape, lambda i: (0, 0)),
            pl.BlockSpec(w3.shape, lambda i: (0, 0)),
            pl.BlockSpec(b3.shape, lambda i: (0, 0)),
        ],
        out_specs=pl.BlockSpec((tb, N_out), lambda i: (i, 0)),
        compiler_params=_COMPILER_PARAMS,
    )(x, w1, b1, w2, b2, w3, b3)
    return out


# ---------------------------------------------------------------------------
# Parameters
# ---------------------------------------------------------------------------
def init_params(key):
    """PyTorch-layout parameters (same init scheme as nn.Conv2d / nn.Linear)."""
    ks = jax.random.split(key, 10)

    def u(k, shape, fan_in):
        bound = 1.0 / float(fan_in) ** 0.5
        return jax.random.uniform(k, shape, jnp.float32, -bound, bound)

    return {
        "conv1_w": u(ks[0], (6, 3, 5, 5), 3 * 25),
        "conv1_b": u(ks[1], (6,), 3 * 25),
        "conv2_w": u(ks[2], (16, 6, 5, 5), 6 * 25),
        "conv2_b": u(ks[3], (16,), 6 * 25),
        "fc1_w": u(ks[4], (120, 16 * 5 * 5), 16 * 5 * 5),
        "fc1_b": u(ks[5], (120,), 16 * 5 * 5),
        "fc2_w": u(ks[6], (84, 120), 120),
        "fc2_b": u(ks[7], (84,), 120),
        "fc3_w": u(ks[8], (10, 84), 84),
        "fc3_b": u(ks[9], (10,), 84),
    }


def prepare_params(p):
    """One-time: flatten/pad/transpose weights into kernel-ready layouts."""
    def conv_w(w, kp):
        co, ci, kh, kw = w.shape
        w2d = w.reshape(co, ci * kh * kw)                 # PyTorch (c, kh, kw) flatten
        w2d = jnp.pad(w2d, ((0, 0), (0, kp - ci * kh * kw)))
        return w2d.astype(jnp.bfloat16)

    return {
        "c1_w": conv_w(p["conv1_w"], 128),                # 75  -> 128
        "c1_b": p["conv1_b"].reshape(-1, 1).astype(jnp.float32),
        "c2_w": conv_w(p["conv2_w"], 256),                # 150 -> 256
        "c2_b": p["conv2_b"].reshape(-1, 1).astype(jnp.float32),
        "fc1_w": p["fc1_w"].T.astype(jnp.bfloat16),       # (400, 120)
        "fc1_b": p["fc1_b"].reshape(1, -1).astype(jnp.float32),
        "fc2_w": p["fc2_w"].T.astype(jnp.bfloat16),       # (120, 84)
        "fc2_b": p["fc2_b"].reshape(1, -1).astype(jnp.float32),
        "fc3_w": p["fc3_w"].T.astype(jnp.bfloat16),       # (84, 10)
        "fc3_b": p["fc3_b"].reshape(1, -1).astype(jnp.float32),
    }


# ---------------------------------------------------------------------------
# Forward pass (matches the PyTorch CNN.forward semantics)
# ---------------------------------------------------------------------------
def cnn_forward(prepared, x):
    # x = self.pool(F.relu(self.conv1(x)))   : (B, 3, 32, 32) -> (B, 6, 14, 14)
    x = conv_relu_pool(x, prepared["c1_w"], prepared["c1_b"], k=5)
    # x = self.pool(F.relu(self.conv2(x)))   : -> (B, 16, 5, 5)
    x = conv_relu_pool(x, prepared["c2_w"], prepared["c2_b"], k=5)
    # x = x.view(-1, 16 * 5 * 5)             : NCHW flatten order preserved
    x = x.reshape(x.shape[0], -1).astype(jnp.bfloat16)
    # fc1 -> ReLU -> fc2 -> ReLU -> fc3 (single fused kernel)
    return mlp_head(x, prepared["fc1_w"], prepared["fc1_b"],
                    prepared["fc2_w"], prepared["fc2_b"],
                    prepared["fc3_w"], prepared["fc3_b"])


if __name__ == "__main__":
    key = jax.random.PRNGKey(0)
    pkey, xkey = jax.random.split(key)
    params = init_params(pkey)
    prepared = prepare_params(params)
    # Input must be 32x32 so the flatten to 16*5*5 matches the PyTorch module.
    x = jax.random.normal(xkey, (2, 3, 32, 32), dtype=jnp.float32)
    out = jax.jit(cnn_forward)(prepared, x)
    out = jax.block_until_ready(out)
    assert out.shape == (2, 10) and out.dtype == jnp.float32
    print("KERNEL_OK")
</pallas_src>

<mosaic_0001>
module attributes {stable_mosaic.version = 11 : i64} {
  func.func @_conv_relu_pool_kernel(%arg0: i32, %arg1: memref<1x4x128x196xbf16, #tpu.memory_space<vmem>>, %arg2: memref<6x128xbf16, #tpu.memory_space<vmem>>, %arg3: memref<6x1xf32, #tpu.memory_space<vmem>>, %arg4: memref<1x6x196xf32, #tpu.memory_space<vmem>>) attributes {dimension_semantics = [#tpu.dimension_semantics<parallel>], iteration_bounds = array<i64: 2>, scalar_prefetch = 0 : i64, scratch_operands = 0 : i64, tpu.core_type = #tpu.core_type<tc>, window_params = [{transform_indices = @transform_0, window_bounds = array<i64: 1, 4, 128, 196>}, {pipeline_mode = #tpu.pipeline_mode<synchronous>, transform_indices = @transform_1, window_bounds = array<i64: 6, 128>}, {pipeline_mode = #tpu.pipeline_mode<synchronous>, transform_indices = @transform_2, window_bounds = array<i64: 6, 1>}, {transform_indices = @transform_3, window_bounds = array<i64: 1, 6, 196>}]} {
    %c0 = arith.constant 0 : index
    %c0_0 = arith.constant 0 : index
    %0 = vector.load %arg2[%c0, %c0_0] : memref<6x128xbf16, #tpu.memory_space<vmem>>, vector<6x128xbf16>
    %c0_1 = arith.constant 0 : index
    %c0_2 = arith.constant 0 : index
    %c0_3 = arith.constant 0 : index
    %c0_4 = arith.constant 0 : index
    %1 = vector.load %arg1[%c0_1, %c0_2, %c0_3, %c0_4] : memref<1x4x128x196xbf16, #tpu.memory_space<vmem>>, vector<1x1x128x196xbf16>
    %2 = vector.shape_cast %1 : vector<1x1x128x196xbf16> to vector<128x196xbf16>
    %cst = arith.constant dense<0.000000e+00> : vector<6x196xf32>
    %3 = tpu.matmul %0, %2, %cst {dimension_numbers = #tpu.dot_dimension_numbers<[1], [0], [0], [1], [0, 0, 1, 1], [], []>} : vector<6x128xbf16>, vector<128x196xbf16>, vector<6x196xf32> -> vector<6x196xf32>
    %c0_5 = arith.constant 0 : index
    %c1 = arith.constant 1 : index
    %c0_6 = arith.constant 0 : index
    %c0_7 = arith.constant 0 : index
    %4 = vector.load %arg1[%c0_5, %c1, %c0_6, %c0_7] : memref<1x4x128x196xbf16, #tpu.memory_space<vmem>>, vector<1x1x128x196xbf16>
    %5 = vector.shape_cast %4 : vector<1x1x128x196xbf16> to vector<128x196xbf16>
    %cst_8 = arith.constant dense<0.000000e+00> : vector<6x196xf32>
    %6 = tpu.matmul %0, %5, %cst_8 {dimension_numbers = #tpu.dot_dimension_numbers<[1], [0], [0], [1], [0, 0, 1, 1], [], []>} : vector<6x128xbf16>, vector<128x196xbf16>, vector<6x196xf32> -> vector<6x196xf32>
    %7 = arith.maximumf %3, %6 : vector<6x196xf32>
    %c0_9 = arith.constant 0 : index
    %c2 = arith.constant 2 : index
    %c0_10 = arith.constant 0 : index
    %c0_11 = arith.constant 0 : index
    %8 = vector.load %arg1[%c0_9, %c2, %c0_10, %c0_11] : memref<1x4x128x196xbf16, #tpu.memory_space<vmem>>, vector<1x1x128x196xbf16>
    %9 = vector.shape_cast %8 : vector<1x1x128x196xbf16> to vector<128x196xbf16>
    %cst_12 = arith.constant dense<0.000000e+00> : vector<6x196xf32>
    %10 = tpu.matmul %0, %9, %cst_12 {dimension_numbers = #tpu.dot_dimension_numbers<[1], [0], [0], [1], [0, 0, 1, 1], [], []>} : vector<6x128xbf16>, vector<128x196xbf16>, vector<6x196xf32> -> vector<6x196xf32>
    %11 = arith.maximumf %7, %10 : vector<6x196xf32>
    %c0_13 = arith.constant 0 : index
    %c3 = arith.constant 3 : index
    %c0_14 = arith.constant 0 : index
    %c0_15 = arith.constant 0 : index
    %12 = vector.load %arg1[%c0_13, %c3, %c0_14, %c0_15] : memref<1x4x128x196xbf16, #tpu.memory_space<vmem>>, vector<1x1x128x196xbf16>
    %13 = vector.shape_cast %12 : vector<1x1x128x196xbf16> to vector<128x196xbf16>
    %cst_16 = arith.constant dense<0.000000e+00> : vector<6x196xf32>
    %14 = tpu.matmul %0, %13, %cst_16 {dimension_numbers = #tpu.dot_dimension_numbers<[1], [0], [0], [1], [0, 0, 1, 1], [], []>} : vector<6x128xbf16>, vector<128x196xbf16>, vector<6x196xf32> -> vector<6x196xf32>
    %15 = arith.maximumf %11, %14 : vector<6x196xf32>
    %c0_17 = arith.constant 0 : index
    %c0_18 = arith.constant 0 : index
    %16 = vector.load %arg3[%c0_17, %c0_18] : memref<6x1xf32, #tpu.memory_space<vmem>>, vector<6x1xf32>
    %17 = vector.broadcast %16 : vector<6x1xf32> to vector<6x196xf32>
    %18 = arith.addf %15, %17 : vector<6x196xf32>
    %cst_19 = arith.constant 0.000000e+00 : f32
    %19 = vector.broadcast %cst_19 : f32 to vector<6x196xf32>
    %20 = arith.maximumf %18, %19 : vector<6x196xf32>
    %c0_20 = arith.constant 0 : index
    %c0_21 = arith.constant 0 : index
    %c0_22 = arith.constant 0 : index
    %21 = vector.load %arg4[%c0_20, %c0_21, %c0_22] : memref<1x6x196xf32, #tpu.memory_space<vmem>>, vector<1x6x196xf32>
    %22 = vector.shape_cast %21 : vector<1x6x196xf32> to vector<6x196xf32>
    %23 = vector.shape_cast %20 : vector<6x196xf32> to vector<1x6x196xf32>
    tpu.vector_store %arg4[%c0_20, %c0_21, %c0_22], %23 {strides = array<i32>} : memref<1x6x196xf32, #tpu.memory_space<vmem>>, vector<1x6x196xf32>,
    return
  }
  func.func @transform_0(%arg0: i32) -> (i32, i32, i32, i32) {
    %c0_i32 = arith.constant 0 : i32
    %c0_i32_0 = arith.constant 0 : i32
    %c0_i32_1 = arith.constant 0 : i32
    %c0_i32_2 = arith.constant 0 : i32
    return %arg0, %c0_i32, %c0_i32_0, %c0_i32_1 : i32, i32, i32, i32
  }
  func.func @transform_1(%arg0: i32) -> (i32, i32) {
    %c0_i32 = arith.constant 0 : i32
    %c0_i32_0 = arith.constant 0 : i32
    %c0_i32_1 = arith.constant 0 : i32
    return %c0_i32, %c0_i32_0 : i32, i32
  }
  func.func @transform_2(%arg0: i32) -> (i32, i32) {
    %c0_i32 = arith.constant 0 : i32
    %c0_i32_0 = arith.constant 0 : i32
    %c0_i32_1 = arith.constant 0 : i32
    return %c0_i32, %c0_i32_0 : i32, i32
  }
  func.func @transform_3(%arg0: i32) -> (i32, i32, i32) {
    %c0_i32 = arith.constant 0 : i32
    %c0_i32_0 = arith.constant 0 : i32
    %c0_i32_1 = arith.constant 0 : i32
    return %arg0, %c0_i32, %c0_i32_0 : i32, i32, i32
  }
}

module attributes {stable_mosaic.version = 11 : i64} {
  func.func @_conv_relu_pool_kernel(%arg0: i32, %arg1: memref<1x4x256x25xbf16, #tpu.memory_space<vmem>>, %arg2: memref<16x256xbf16, #tpu.memory_space<vmem>>, %arg3: memref<16x1xf32, #tpu.memory_space<vmem>>, %arg4: memref<1x16x25xf32, #tpu.memory_space<vmem>>) attributes {dimension_semantics = [#tpu.dimension_semantics<parallel>], iteration_bounds = array<i64: 2>, scalar_prefetch = 0 : i64, scratch_operands = 0 : i64, tpu.core_type = #tpu.core_type<tc>, window_params = [{transform_indices = @transform_0, window_bounds = array<i64: 1, 4, 256, 25>}, {pipeline_mode = #tpu.pipeline_mode<synchronous>, transform_indices = @transform_1, window_bounds = array<i64: 16, 256>}, {pipeline_mode = #tpu.pipeline_mode<synchronous>, transform_indices = @transform_2, window_bounds = array<i64: 16, 1>}, {transform_indices = @transform_3, window_bounds = array<i64: 1, 16, 25>}]} {
    %c0 = arith.constant 0 : index
    %c0_0 = arith.constant 0 : index
    %0 = vector.load %arg2[%c0, %c0_0] : memref<16x256xbf16, #tpu.memory_space<vmem>>, vector<16x256xbf16>
    %c0_1 = arith.constant 0 : index
    %c0_2 = arith.constant 0 : index
    %c0_3 = arith.constant 0 : index
    %c0_4 = arith.constant 0 : index
    %1 = vector.load %arg1[%c0_1, %c0_2, %c0_3, %c0_4] : memref<1x4x256x25xbf16, #tpu.memory_space<vmem>>, vector<1x1x256x25xbf16>
    %2 = vector.shape_cast %1 : vector<1x1x256x25xbf16> to vector<256x25xbf16>
    %cst = arith.constant dense<0.000000e+00> : vector<16x25xf32>
    %3 = tpu.matmul %0, %2, %cst {dimension_numbers = #tpu.dot_dimension_numbers<[1], [0], [0], [1], [0, 0, 1, 1], [], []>} : vector<16x256xbf16>, vector<256x25xbf16>, vector<16x25xf32> -> vector<16x25xf32>
    %c0_5 = arith.constant 0 : index
    %c1 = arith.constant 1 : index
    %c0_6 = arith.constant 0 : index
    %c0_7 = arith.constant 0 : index
    %4 = vector.load %arg1[%c0_5, %c1, %c0_6, %c0_7] : memref<1x4x256x25xbf16, #tpu.memory_space<vmem>>, vector<1x1x256x25xbf16>
    %5 = vector.shape_cast %4 : vector<1x1x256x25xbf16> to vector<256x25xbf16>
    %cst_8 = arith.constant dense<0.000000e+00> : vector<16x25xf32>
    %6 = tpu.matmul %0, %5, %cst_8 {dimension_numbers = #tpu.dot_dimension_numbers<[1], [0], [0], [1], [0, 0, 1, 1], [], []>} : vector<16x256xbf16>, vector<256x25xbf16>, vector<16x25xf32> -> vector<16x25xf32>
    %7 = arith.maximumf %3, %6 : vector<16x25xf32>
    %c0_9 = arith.constant 0 : index
    %c2 = arith.constant 2 : index
    %c0_10 = arith.constant 0 : index
    %c0_11 = arith.constant 0 : index
    %8 = vector.load %arg1[%c0_9, %c2, %c0_10, %c0_11] : memref<1x4x256x25xbf16, #tpu.memory_space<vmem>>, vector<1x1x256x25xbf16>
    %9 = vector.shape_cast %8 : vector<1x1x256x25xbf16> to vector<256x25xbf16>
    %cst_12 = arith.constant dense<0.000000e+00> : vector<16x25xf32>
    %10 = tpu.matmul %0, %9, %cst_12 {dimension_numbers = #tpu.dot_dimension_numbers<[1], [0], [0], [1], [0, 0, 1, 1], [], []>} : vector<16x256xbf16>, vector<256x25xbf16>, vector<16x25xf32> -> vector<16x25xf32>
    %11 = arith.maximumf %7, %10 : vector<16x25xf32>
    %c0_13 = arith.constant 0 : index
    %c3 = arith.constant 3 : index
    %c0_14 = arith.constant 0 : index
    %c0_15 = arith.constant 0 : index
    %12 = vector.load %arg1[%c0_13, %c3, %c0_14, %c0_15] : memref<1x4x256x25xbf16, #tpu.memory_space<vmem>>, vector<1x1x256x25xbf16>
    %13 = vector.shape_cast %12 : vector<1x1x256x25xbf16> to vector<256x25xbf16>
    %cst_16 = arith.constant dense<0.000000e+00> : vector<16x25xf32>
    %14 = tpu.matmul %0, %13, %cst_16 {dimension_numbers = #tpu.dot_dimension_numbers<[1], [0], [0], [1], [0, 0, 1, 1], [], []>} : vector<16x256xbf16>, vector<256x25xbf16>, vector<16x25xf32> -> vector<16x25xf32>
    %15 = arith.maximumf %11, %14 : vector<16x25xf32>
    %c0_17 = arith.constant 0 : index
    %c0_18 = arith.constant 0 : index
    %16 = vector.load %arg3[%c0_17, %c0_18] : memref<16x1xf32, #tpu.memory_space<vmem>>, vector<16x1xf32>
    %17 = vector.broadcast %16 : vector<16x1xf32> to vector<16x25xf32>
    %18 = arith.addf %15, %17 : vector<16x25xf32>
    %cst_19 = arith.constant 0.000000e+00 : f32
    %19 = vector.broadcast %cst_19 : f32 to vector<16x25xf32>
    %20 = arith.maximumf %18, %19 : vector<16x25xf32>
    %c0_20 = arith.constant 0 : index
    %c0_21 = arith.constant 0 : index
    %c0_22 = arith.constant 0 : index
    %21 = vector.load %arg4[%c0_20, %c0_21, %c0_22] : memref<1x16x25xf32, #tpu.memory_space<vmem>>, vector<1x16x25xf32>
    %22 = vector.shape_cast %21 : vector<1x16x25xf32> to vector<16x25xf32>
    %23 = vector.shape_cast %20 : vector<16x25xf32> to vector<1x16x25xf32>
    tpu.vector_store %arg4[%c0_20, %c0_21, %c0_22], %23 {strides = array<i32>} : memref<1x16x25xf32, #tpu.memory_space<vmem>>, vector<1x16x25xf32>,
    return
  }
  func.func @transform_0(%arg0: i32) -> (i32, i32, i32, i32) {
    %c0_i32 = arith.constant 0 : i32
    %c0_i32_0 = arith.constant 0 : i32
    %c0_i32_1 = arith.constant 0 : i32
    %c0_i32_2 = arith.constant 0 : i32
    return %arg0, %c0_i32, %c0_i32_0, %c0_i32_1 : i32, i32, i32, i32
  }
  func.func @transform_1(%arg0: i32) -> (i32, i32) {
    %c0_i32 = arith.constant 0 : i32
    %c0_i32_0 = arith.constant 0 : i32
    %c0_i32_1 = arith.constant 0 : i32
    return %c0_i32, %c0_i32_0 : i32, i32
  }
  func.func @transform_2(%arg0: i32) -> (i32, i32) {
    %c0_i32 = arith.constant 0 : i32
    %c0_i32_0 = arith.constant 0 : i32
    %c0_i32_1 = arith.constant 0 : i32
    return %c0_i32, %c0_i32_0 : i32, i32
  }
  func.func @transform_3(%arg0: i32) -> (i32, i32, i32) {
    %c0_i32 = arith.constant 0 : i32
    %c0_i32_0 = arith.constant 0 : i32
    %c0_i32_1 = arith.constant 0 : i32
    return %arg0, %c0_i32, %c0_i32_0 : i32, i32, i32
  }
}

module attributes {stable_mosaic.version = 11 : i64} {
  func.func @_mlp_kernel(%arg0: i32, %arg1: memref<2x400xbf16, #tpu.memory_space<vmem>>, %arg2: memref<400x120xbf16, #tpu.memory_space<vmem>>, %arg3: memref<1x120xf32, #tpu.memory_space<vmem>>, %arg4: memref<120x84xbf16, #tpu.memory_space<vmem>>, %arg5: memref<1x84xf32, #tpu.memory_space<vmem>>, %arg6: memref<84x10xbf16, #tpu.memory_space<vmem>>, %arg7: memref<1x10xf32, #tpu.memory_space<vmem>>, %arg8: memref<2x10xf32, #tpu.memory_space<vmem>>) attributes {dimension_semantics = [#tpu.dimension_semantics<parallel>], iteration_bounds = array<i64: 1>, scalar_prefetch = 0 : i64, scratch_operands = 0 : i64, tpu.core_type = #tpu.core_type<tc>, window_params = [{transform_indices = @transform_0, window_bounds = array<i64: 2, 400>}, {pipeline_mode = #tpu.pipeline_mode<synchronous>, transform_indices = @transform_1, window_bounds = array<i64: 400, 120>}, {pipeline_mode = #tpu.pipeline_mode<synchronous>, transform_indices = @transform_2, window_bounds = array<i64: 1, 120>}, {pipeline_mode = #tpu.pipeline_mode<synchronous>, transform_indices = @transform_3, window_bounds = array<i64: 120, 84>}, {pipeline_mode = #tpu.pipeline_mode<synchronous>, transform_indices = @transform_4, window_bounds = array<i64: 1, 84>}, {pipeline_mode = #tpu.pipeline_mode<synchronous>, transform_indices = @transform_5, window_bounds = array<i64: 84, 10>}, {pipeline_mode = #tpu.pipeline_mode<synchronous>, transform_indices = @transform_6, window_bounds = array<i64: 1, 10>}, {transform_indices = @transform_7, window_bounds = array<i64: 2, 10>}]} {
    %c0 = arith.constant 0 : index
    %c0_0 = arith.constant 0 : index
    %0 = vector.load %arg1[%c0, %c0_0] : memref<2x400xbf16, #tpu.memory_space<vmem>>, vector<2x400xbf16>
    %c0_1 = arith.constant 0 : index
    %c0_2 = arith.constant 0 : index
    %1 = vector.load %arg2[%c0_1, %c0_2] : memref<400x120xbf16, #tpu.memory_space<vmem>>, vector<400x120xbf16>
    %cst = arith.constant dense<0.000000e+00> : vector<2x120xf32>
    %2 = tpu.matmul %0, %1, %cst {dimension_numbers = #tpu.dot_dimension_numbers<[1], [0], [0], [1], [0, 0, 1, 1], [], []>} : vector<2x400xbf16>, vector<400x120xbf16>, vector<2x120xf32> -> vector<2x120xf32>
    %c0_3 = arith.constant 0 : index
    %c0_4 = arith.constant 0 : index
    %3 = vector.load %arg3[%c0_3, %c0_4] : memref<1x120xf32, #tpu.memory_space<vmem>>, vector<1x120xf32>
    %4 = vector.broadcast %3 : vector<1x120xf32> to vector<2x120xf32>
    %5 = arith.addf %2, %4 : vector<2x120xf32>
    %cst_5 = arith.constant 0.000000e+00 : f32
    %6 = vector.broadcast %cst_5 : f32 to vector<2x120xf32>
    %7 = arith.maximumf %5, %6 : vector<2x120xf32>
    %8 = arith.truncf %7 : vector<2x120xf32> to vector<2x120xbf16>
    %c0_6 = arith.constant 0 : index
    %c0_7 = arith.constant 0 : index
    %9 = vector.load %arg4[%c0_6, %c0_7] : memref<120x84xbf16, #tpu.memory_space<vmem>>, vector<120x84xbf16>
    %cst_8 = arith.constant dense<0.000000e+00> : vector<2x84xf32>
    %10 = tpu.matmul %8, %9, %cst_8 {dimension_numbers = #tpu.dot_dimension_numbers<[1], [0], [0], [1], [0, 0, 1, 1], [], []>} : vector<2x120xbf16>, vector<120x84xbf16>, vector<2x84xf32> -> vector<2x84xf32>
    %c0_9 = arith.constant 0 : index
    %c0_10 = arith.constant 0 : index
    %11 = vector.load %arg5[%c0_9, %c0_10] : memref<1x84xf32, #tpu.memory_space<vmem>>, vector<1x84xf32>
    %12 = vector.broadcast %11 : vector<1x84xf32> to vector<2x84xf32>
    %13 = arith.addf %10, %12 : vector<2x84xf32>
    %cst_11 = arith.constant 0.000000e+00 : f32
    %14 = vector.broadcast %cst_11 : f32 to vector<2x84xf32>
    %15 = arith.maximumf %13, %14 : vector<2x84xf32>
    %16 = arith.truncf %15 : vector<2x84xf32> to vector<2x84xbf16>
    %c0_12 = arith.constant 0 : index
    %c0_13 = arith.constant 0 : index
    %17 = vector.load %arg6[%c0_12, %c0_13] : memref<84x10xbf16, #tpu.memory_space<vmem>>, vector<84x10xbf16>
    %cst_14 = arith.constant dense<0.000000e+00> : vector<2x10xf32>
    %18 = tpu.matmul %16, %17, %cst_14 {dimension_numbers = #tpu.dot_dimension_numbers<[1], [0], [0], [1], [0, 0, 1, 1], [], []>} : vector<2x84xbf16>, vector<84x10xbf16>, vector<2x10xf32> -> vector<2x10xf32>
    %c0_15 = arith.constant 0 : index
    %c0_16 = arith.constant 0 : index
    %19 = vector.load %arg7[%c0_15, %c0_16] : memref<1x10xf32, #tpu.memory_space<vmem>>, vector<1x10xf32>
    %20 = vector.broadcast %19 : vector<1x10xf32> to vector<2x10xf32>
    %21 = arith.addf %18, %20 : vector<2x10xf32>
    %c0_17 = arith.constant 0 : index
    %c0_18 = arith.constant 0 : index
    %22 = vector.load %arg8[%c0_17, %c0_18] : memref<2x10xf32, #tpu.memory_space<vmem>>, vector<2x10xf32>
    tpu.vector_store %arg8[%c0_17, %c0_18], %21 {strides = array<i32>} : memref<2x10xf32, #tpu.memory_space<vmem>>, vector<2x10xf32>,
    return
  }
  func.func @transform_0(%arg0: i32) -> (i32, i32) {
    %c0_i32 = arith.constant 0 : i32
    %c0_i32_0 = arith.constant 0 : i32
    return %arg0, %c0_i32 : i32, i32
  }
  func.func @transform_1(%arg0: i32) -> (i32, i32) {
    %c0_i32 = arith.constant 0 : i32
    %c0_i32_0 = arith.constant 0 : i32
    %c0_i32_1 = arith.constant 0 : i32
    return %c0_i32, %c0_i32_0 : i32, i32
  }
  func.func @transform_2(%arg0: i32) -> (i32, i32) {
    %c0_i32 = arith.constant 0 : i32
    %c0_i32_0 = arith.constant 0 : i32
    %c0_i32_1 = arith.constant 0 : i32
    return %c0_i32, %c0_i32_0 : i32, i32
  }
  func.func @transform_3(%arg0: i32) -> (i32, i32) {
    %c0_i32 = arith.constant 0 : i32
    %c0_i32_0 = arith.constant 0 : i32
    %c0_i32_1 = arith.constant 0 : i32
    return %c0_i32, %c0_i32_0 : i32, i32
  }
  func.func @transform_4(%arg0: i32) -> (i32, i32) {
    %c0_i32 = arith.constant 0 : i32
    %c0_i32_0 = arith.constant 0 : i32
    %c0_i32_1 = arith.constant 0 : i32
    return %c0_i32, %c0_i32_0 : i32, i32
  }
  func.func @transform_5(%arg0: i32) -> (i32, i32) {
    %c0_i32 = arith.constant 0 : i32
    %c0_i32_0 = arith.constant 0 : i32
    %c0_i32_1 = arith.constant 0 : i32
    return %c0_i32, %c0_i32_0 : i32, i32
  }
  func.func @transform_6(%arg0: i32) -> (i32, i32) {
    %c0_i32 = arith.constant 0 : i32
    %c0_i32_0 = arith.constant 0 : i32
    %c0_i32_1 = arith.constant 0 : i32
    return %c0_i32, %c0_i32_0 : i32, i32
  }
  func.func @transform_7(%arg0: i32) -> (i32, i32) {
    %c0_i32 = arith.constant 0 : i32
    %c0_i32_0 = arith.constant 0 : i32
    return %arg0, %c0_i32 : i32, i32
  }
}

</mosaic_0001>

<llo_original>
// kernel: cnn_forward.3
$region0: #{cnn_forward.3}
  #allocation0 [shape = 'u32[]', space=smem, size = 0x4, offset = 0x4, fixed_abs, tag = 'smem constant byte address 0x4 - core index']
  #allocation1 [shape = 'u32[144,128]{1,0:T(1,128)}', space=vmem, size = 0x12000, scoped, tag = 'internal scratch']
  %s0 = inlined_call_operand.vmem [shape: bf16[2,4,128,196], index: 0, kind: input, shape index: {}]
  %s1 = inlined_call_operand.vmem [shape: bf16[6,128], index: 1, kind: input, shape index: {}]
  %s2 = inlined_call_operand.vmem [shape: f32[6,1], index: 2, kind: input, shape index: {}]
  %s3 = inlined_call_operand.vmem [shape: f32[2,6,196], index: 3, kind: output, shape index: {}]
  %s4 = sld [smem:[#allocation0]]
  $region45: #{cnn_forward.3} parent=0
    _
  %s6 = ssub.s32 1, %s4
  %s7 = scalar_select 0, %s6, %s4
  loop: start=0, step=1, limit=4
  $region2: #{cnn_forward.3} parent=0 // loop_pre_header
    _
  $region3: #{cnn_forward.3} parent=0 // loop_header
    %s9 = sphi 0, %s13
    %p10 = scmp.ge.s32.totalorder %s9, 4
    %s19 = sphi 0, %s21
    %s22 = sphi 0, %s19
    %s23 = sphi 0, %s22
    %s39 = sphi 0, %s23
    %s43 = sphi 0, %s43
    %s45 = sphi 0, %s43
    %s46 = sphi 0, %s45
    %s60 = sphi 0, %s46
    %s64 = sphi 0, %s64
    %s66 = sphi 0, %s64
    %s67 = sphi 0, %s66
    %s81 = sphi 0, %s67
    %s87 = sphi 0, %s89
    %s90 = sphi 0, %s87
    %s91 = sphi 0, %s90
    %s107 = sphi 0, %s91
  $region4: #{cnn_forward.3} parent=0 // loop_header_branch
    %12 = sbr.rel (%p10) target = $region8
  $region5: #{cnn_forward.3} parent=0 // loop_body
    %s14 = ssub.s32 %s9, 1
    %s15 = ssub.s32 %s9, 2
    %s16 = sadd.s32 %s9, 1
    %s17 = ssub.s32 %s9, %s16
    %p18 = scmp.eq.s32.totalorder %s17, 0
    %s20 = sadd.s32 %s19, 1
    %s21 = scalar_select %p18, %s19, %s20
    %p24 = pneg %p18
    %p25 = scmp.eq.s32.totalorder %s9, 1
    %p26 = por %p24, %p25
    %p27 = scmp.ne.s32.totalorder %s19, %s22
    %p28 = scmp.eq.s32.totalorder %s9, 0
    %p29 = por %p27, %p28
    %p30 = scmp.ne.s32.totalorder %s19, %s22
    %p31 = scmp.eq.s32.totalorder %s14, 1
    %p32 = por %p30, %p31
    %p33 = scmp.ne.s32.totalorder %s22, %s23
    %p34 = scmp.eq.s32.totalorder %s14, 0
    %p35 = por %p33, %p34
    %p36 = scmp.ne.s32.totalorder %s22, %s23
    %p37 = scmp.eq.s32.totalorder %s15, 1
    %p38 = por %p36, %p37
    %p40 = scmp.ne.s32.totalorder %s23, %s39
    %p41 = scmp.eq.s32.totalorder %s15, 0
    %p42 = por %p40, %p41
    %s44 = sadd.s32 %s43, 1
    %p47 = scmp.eq.s32.totalorder %s9, 1
    %p48 = scmp.ne.s32.totalorder %s43, %s45
    %p49 = scmp.eq.s32.totalorder %s9, 0
    %p50 = por %p48, %p49
    %p51 = scmp.ne.s32.totalorder %s43, %s45
    %p52 = scmp.eq.s32.totalorder %s14, 1
    %p53 = por %p51, %p52
    %p54 = scmp.ne.s32.totalorder %s45, %s46
    %p55 = scmp.eq.s32.totalorder %s14, 0
    %p56 = por %p54, %p55
    %p57 = scmp.ne.s32.totalorder %s45, %s46
    %p58 = scmp.eq.s32.totalorder %s15, 1
    %p59 = por %p57, %p58
    %p61 = scmp.ne.s32.totalorder %s46, %s60
    %p62 = scmp.eq.s32.totalorder %s15, 0
    %p63 = por %p61, %p62
    %s65 = sadd.s32 %s64, 1
    %p68 = scmp.eq.s32.totalorder %s9, 1
    %p69 = scmp.ne.s32.totalorder %s64, %s66
    %p70 = scmp.eq.s32.totalorder %s9, 0
    %p71 = por %p69, %p70
    %p72 = scmp.ne.s32.totalorder %s64, %s66
    %p73 = scmp.eq.s32.totalorder %s14, 1
    %p74 = por %p72, %p73
    %p75 = scmp.ne.s32.totalorder %s66, %s67
    %p76 = scmp.eq.s32.totalorder %s14, 0
    %p77 = por %p75, %p76
    %p78 = scmp.ne.s32.totalorder %s66, %s67
    %p79 = scmp.eq.s32.totalorder %s15, 1
    %p80 = por %p78, %p79
    %p82 = scmp.ne.s32.totalorder %s67, %s81
    %p83 = scmp.eq.s32.totalorder %s15, 0
    %p84 = por %p82, %p83
    %s85 = ssub.s32 %s9, %s16
    %p86 = scmp.eq.s32.totalorder %s85, 0
    %s88 = sadd.s32 %s87, 1
    %s89 = scalar_select %p86, %s87, %s88
    %p92 = pneg %p86
    %p93 = scmp.eq.s32.totalorder %s9, 1
    %p94 = por %p92, %p93
    %p95 = scmp.ne.s32.totalorder %s87, %s90
    %p96 = scmp.eq.s32.totalorder %s9, 0
    %p97 = por %p95, %p96
    %p98 = scmp.ne.s32.totalorder %s87, %s90
    %p99 = scmp.eq.s32.totalorder %s14, 1
    %p100 = por %p98, %p99
    %p101 = scmp.ne.s32.totalorder %s90, %s91
    %p102 = scmp.eq.s32.totalorder %s14, 0
    %p103 = por %p101, %p102
    %p104 = scmp.ne.s32.totalorder %s90, %s91
    %p105 = scmp.eq.s32.totalorder %s15, 1
    %p106 = por %p104, %p105
    %p108 = scmp.ne.s32.totalorder %s91, %s107
    %p109 = scmp.eq.s32.totalorder %s15, 0
    %p110 = por %p108, %p109
    %p111 = scmp.le.s32.totalorder 1, %s9
    %p112 = scmp.lt.s32.totalorder %s9, 3
    %p113 = pnand %p111, %p112
    %p114 = pneg %p113
    // Predicated region
    $region9: #{cnn_forward.3} parent=5 // pred_check
      _
    $region10: #{cnn_forward.3} parent=5 // pred_check_branch
      %116 = sbr.rel (%p113) target = $region12
    $region11: #{cnn_forward.3} parent=5 // pred_region
      %s117 = ssub.s32 %s9, 1
      // Predicated region
      $region13: #{cnn_forward.3} parent=11 // pred_check
        %p118 = pneg %p56
      $region14: #{cnn_forward.3} parent=11 // pred_check_branch
        %120 = sbr.rel (%p118) target = $region16
      $region15: #{cnn_forward.3} parent=11 // pred_region
        _
      $region16: #{cnn_forward.3} parent=11 // pred_fallthru
        _
      // Predicated region
      $region17: #{cnn_forward.3} parent=11 // pred_check
        %p121 = pneg %p77
      $region18: #{cnn_forward.3} parent=11 // pred_check_branch
        %123 = sbr.rel (%p121) target = $region20
      $region19: #{cnn_forward.3} parent=11 // pred_region
        _
      $region20: #{cnn_forward.3} parent=11 // pred_fallthru
        _
    $region12: #{cnn_forward.3} parent=5 // pred_fallthru
      _
    %p124 = scmp.lt.s32.totalorder %s9, 2
    // Predicated region
    $region21: #{cnn_forward.3} parent=5 // pred_check
      %p125 = pneg %p124
    $region22: #{cnn_forward.3} parent=5 // pred_check_branch
      %127 = sbr.rel (%p125) target = $region24
    $region23: #{cnn_forward.3} parent=5 // pred_region
      // Predicated region
      $region25: #{cnn_forward.3} parent=23 // pred_check
        %p128 = pneg %p29
      $region26: #{cnn_forward.3} parent=23 // pred_check_branch
        %130 = sbr.rel (%p128) target = $region28
      $region27: #{cnn_forward.3} parent=23 // pred_region
        %p131 = scmp.lt.s32.totalorder %s9, 1
        %s132 = scalar_select %p131, %s9, 1
        %s133 = smul.addr %s132, 128
        %s134 = smul.addr %s133, 4
        %s135 = scalar_lea.vmem %s0, %s134
      $region28: #{cnn_forward.3} parent=23 // pred_fallthru
        _
    $region24: #{cnn_forward.3} parent=5 // pred_fallthru
      _
    %p136 = scmp.le.s32.totalorder 1, %s9
    %p137 = scmp.lt.s32.totalorder %s9, 3
    %p138 = pnand %p136, %p137
    %p139 = pneg %p138
    // Predicated region
    $region29: #{cnn_forward.3} parent=5 // pred_check
      _
    $region30: #{cnn_forward.3} parent=5 // pred_check_branch
      %141 = sbr.rel (%p138) target = $region32
    $region31: #{cnn_forward.3} parent=5 // pred_region
      %s142 = ssub.s32 %s9, 1
      %p143 = scmp.lt.s32.totalorder %s14, 1
      %s144 = scalar_select %p143, %s14, 1
      %s145 = smul.addr %s144, 128
      %s146 = smul.addr %s145, 4
      %s147 = scalar_lea.vmem %s0, %s146
      %p148 = pneg %p35
      %p149 = pneg %p32
      %p150 = pneg %p56
      %p151 = pneg %p53
      %p152 = pneg %p77
      %p153 = pneg %p74
      %p154 = pneg %p103
      %p155 = pneg %p100
      %p156 = scmp.lt.s32.totalorder %s14, 1
      %s157 = scalar_select %p156, %s14, 1
      %s158 = smul.addr %s157, 2
      %s159 = smul.addr %s158, 8
      %s160 = scalar_lea.vmem %s3, %s159
      %p161 = scmp.lt.s32.totalorder %s14, 1
      %s162 = scalar_select %p161, %s14, 1
      %s163 = smul.addr %s162, 128
      %s164 = smul.addr %s163, 4
      %s165 = scalar_lea.vmem %s0, %s164
      %p166 = scmp.lt.s32.totalorder %s14, 1
      %s167 = scalar_select %p166, %s14, 1
      %s168 = smul.addr %s167, 2
      %s169 = smul.addr %s168, 8
      %s170 = scalar_lea.vmem %s3, %s169
      %v172 = vld [vmem:[%s1] sm:$0x7]
      %v173 = vld [vmem:[%s165] sm:$0xff]
      %v174 = vld [vmem:[%s165 + $0x8] sm:$0xff]
      %v175 = vld [vmem:[%s165 + $0x10] sm:$0xff]
      %v176 = vld [vmem:[%s165 + $0x18] sm:$0xff]
      %v177 = vld [vmem:[%s165 + $0x20] sm:$0xff]
      %v178 = vld [vmem:[%s165 + $0x28] sm:$0xff]
      %v179 = vld [vmem:[%s165 + $0x30] sm:$0xff]
      %v180 = vld [vmem:[%s165 + $0x38] sm:$0xff]
      %v181 = vld [vmem:[%s165 + $0x40] sm:$0xff]
      %v182 = vld [vmem:[%s165 + $0x48] sm:$0xff]
      %v183 = vld [vmem:[%s165 + $0x50] sm:$0xff]
      %v184 = vld [vmem:[%s165 + $0x58] sm:$0xff]
      %v185 = vld [vmem:[%s165 + $0x60] sm:$0xff]
      %v186 = vld [vmem:[%s165 + $0x68] sm:$0xff]
      %v187 = vld [vmem:[%s165 + $0x70] sm:$0xff]
      %v188 = vld [vmem:[%s165 + $0x78] sm:$0xff]
      %v205 = vunpack.c.l.b16 %v173
      %v206 = vunpack.c.h.b16 %v173
      %v207 = vunpack.c.l.b16 %v174
      %v208 = vunpack.c.h.b16 %v174
      %v209 = vunpack.c.l.b16 %v175
      %v210 = vunpack.c.h.b16 %v175
      %v211 = vunpack.c.l.b16 %v176
      %v212 = vunpack.c.h.b16 %v176
      %v213 = vunpack.c.l.b16 %v177
      %v214 = vunpack.c.h.b16 %v177
      %v215 = vunpack.c.l.b16 %v178
      %v216 = vunpack.c.h.b16 %v178
      %v217 = vunpack.c.l.b16 %v179
      %v218 = vunpack.c.h.b16 %v179
      %v219 = vunpack.c.l.b16 %v180
      %v220 = vunpack.c.h.b16 %v180
      %v221 = vunpack.c.l.b16 %v181
      %v222 = vunpack.c.h.b16 %v181
      %v223 = vunpack.c.l.b16 %v182
      %v224 = vunpack.c.h.b16 %v182
      %v225 = vunpack.c.l.b16 %v183
      %v226 = vunpack.c.h.b16 %v183
      %v227 = vunpack.c.l.b16 %v184
      %v228 = vunpack.c.h.b16 %v184
      %v229 = vunpack.c.l.b16 %v185
      %v230 = vunpack.c.h.b16 %v185
      %v231 = vunpack.c.l.b16 %v186
      %v232 = vunpack.c.h.b16 %v186
      %v233 = vunpack.c.l.b16 %v187
      %v234 = vunpack.c.h.b16 %v187
      %v235 = vunpack.c.l.b16 %v188
      %v236 = vunpack.c.h.b16 %v188
      %v237 = vpack.c.b16 %v207, %v205
      %v238 = vpack.c.b16 %v208, %v206
      %v239 = vpack.c.b16 %v211, %v209
      %v240 = vpack.c.b16 %v212, %v210
      %v241 = vpack.c.b16 %v215, %v213
      %v242 = vpack.c.b16 %v216, %v214
      %v243 = vpack.c.b16 %v219, %v217
      %v244 = vpack.c.b16 %v220, %v218
      %v245 = vpack.c.b16 %v223, %v221
      %v246 = vpack.c.b16 %v224, %v222
      %v247 = vpack.c.b16 %v227, %v225
      %v248 = vpack.c.b16 %v228, %v226
      %v249 = vpack.c.b16 %v231, %v229
      %v250 = vpack.c.b16 %v232, %v230
      %v251 = vpack.c.b16 %v235, %v233
      %v252 = vpack.c.b16 %v236, %v234
      %269 = vmatprep.subr.bf16.mxu0 %v238
      %270 = vmatpush1.bf16.msra.mxu0 %v237
      %271 = vmatprep.subr.bf16.mxu0 %v240
      %272 = vmatpush1.bf16.msra.mxu0 %v239
      %273 = vmatprep.subr.bf16.mxu0 %v242
      %274 = vmatpush1.bf16.msra.mxu0 %v241
      %275 = vmatprep.subr.bf16.mxu0 %v244
      %276 = vmatpush1.bf16.msra.mxu0 %v243
      %277 = vmatprep.subr.bf16.mxu0 %v246
      %278 = vmatpush1.bf16.msra.mxu0 %v245
      %279 = vmatprep.subr.bf16.mxu0 %v248
      %280 = vmatpush1.bf16.msra.mxu0 %v247
      %281 = vmatprep.subr.bf16.mxu0 %v250
      %282 = vmatpush1.bf16.msra.mxu0 %v249
      %283 = vmatprep.subr.bf16.mxu0 %v252
      %284 = vmatpush1.bf16.msra.mxu0 %v251
      %285 = vmatprep.subr.bf16.mxu0 0
      %286 = vmatpush1.bf16.msra.mxu0 0
      %287 = vmatprep.subr.bf16.mxu0 0
      %288 = vmatpush1.bf16.msra.mxu0 0
      %289 = vmatprep.subr.bf16.mxu0 0
      %290 = vmatpush1.bf16.msra.mxu0 0
      %291 = vmatprep.subr.bf16.mxu0 0
      %292 = vmatpush1.bf16.msra.mxu0 0
      %293 = vmatprep.subr.bf16.mxu0 0
      %294 = vmatpush1.bf16.msra.mxu0 0
      %295 = vmatprep.subr.bf16.mxu0 0
      %296 = vmatpush1.bf16.msra.mxu0 0
      %297 = vmatprep.subr.bf16.mxu0 0
      %298 = vmatpush1.bf16.msra.mxu0 0
      %299 = vmatprep.subr.bf16.mxu0 0
      %300 = vmatpush1.bf16.msra.mxu0 0
      %301 = vmatprep.mubr.bf16.mxu0 0
      %302 = vmatmul.mubr.bf16.gmra.mrb[0].mxu0 %v172
      %v303 = vpop.f32.mrb[0].mxu0
      %v304 = vadd.f32 0.0, %v303
      %v305 = vpop.f32.mrb[0].mxu0
      %v306 = vadd.f32 0.0, %v305
      %v307 = vpop.f32.mrb[0].mxu0
      %v308 = vpop.f32.mrb[0].mxu0
      %309 = vdwg.mxu0
      %s310 = scalar_lea.vmem %s165, 128
      %v311 = vld [vmem:[%s310] sm:$0xff]
      %v312 = vld [vmem:[%s310 + $0x8] sm:$0xff]
      %v313 = vld [vmem:[%s310 + $0x10] sm:$0xff]
      %v314 = vld [vmem:[%s310 + $0x18] sm:$0xff]
      %v315 = vld [vmem:[%s310 + $0x20] sm:$0xff]
      %v316 = vld [vmem:[%s310 + $0x28] sm:$0xff]
      %v317 = vld [vmem:[%s310 + $0x30] sm:$0xff]
      %v318 = vld [vmem:[%s310 + $0x38] sm:$0xff]
      %v319 = vld [vmem:[%s310 + $0x40] sm:$0xff]
      %v320 = vld [vmem:[%s310 + $0x48] sm:$0xff]
      %v321 = vld [vmem:[%s310 + $0x50] sm:$0xff]
      %v322 = vld [vmem:[%s310 + $0x58] sm:$0xff]
      %v323 = vld [vmem:[%s310 + $0x60] sm:$0xff]
      %v324 = vld [vmem:[%s310 + $0x68] sm:$0xff]
      %v325 = vld [vmem:[%s310 + $0x70] sm:$0xff]
      %v326 = vld [vmem:[%s310 + $0x78] sm:$0xff]
      %v343 = vunpack.c.l.b16 %v311
      %v344 = vunpack.c.h.b16 %v311
      %v345 = vunpack.c.l.b16 %v312
      %v346 = vunpack.c.h.b16 %v312
      %v347 = vunpack.c.l.b16 %v313
      %v348 = vunpack.c.h.b16 %v313
      %v349 = vunpack.c.l.b16 %v314
      %v350 = vunpack.c.h.b16 %v314
      %v351 = vunpack.c.l.b16 %v315
      %v352 = vunpack.c.h.b16 %v315
      %v353 = vunpack.c.l.b16 %v316
      %v354 = vunpack.c.h.b16 %v316
      %v355 = vunpack.c.l.b16 %v317
      %v356 = vunpack.c.h.b16 %v317
      %v357 = vunpack.c.l.b16 %v318
      %v358 = vunpack.c.h.b16 %v318
      %v359 = vunpack.c.l.b16 %v319
      %v360 = vunpack.c.h.b16 %v319
      %v361 = vunpack.c.l.b16 %v320
      %v362 = vunpack.c.h.b16 %v320
      %v363 = vunpack.c.l.b16 %v321
      %v364 = vunpack.c.h.b16 %v321
      %v365 = vunpack.c.l.b16 %v322
      %v366 = vunpack.c.h.b16 %v322
      %v367 = vunpack.c.l.b16 %v323
      %v368 = vunpack.c.h.b16 %v323
      %v369 = vunpack.c.l.b16 %v324
      %v370 = vunpack.c.h.b16 %v324
      %v371 = vunpack.c.l.b16 %v325
      %v372 = vunpack.c.h.b16 %v325
      %v373 = vunpack.c.l.b16 %v326
      %v374 = vunpack.c.h.b16 %v326
      %v375 = vpack.c.b16 %v345, %v343
      %v376 = vpack.c.b16 %v346, %v344
      %v377 = vpack.c.b16 %v349, %v347
      %v378 = vpack.c.b16 %v350, %v348
      %v379 = vpack.c.b16 %v353, %v351
      %v380 = vpack.c.b16 %v354, %v352
      %v381 = vpack.c.b16 %v357, %v355
      %v382 = vpack.c.b16 %v358, %v356
      %v383 = vpack.c.b16 %v361, %v359
      %v384 = vpack.c.b16 %v362, %v360
      %v385 = vpack.c.b16 %v365, %v363
      %v386 = vpack.c.b16 %v366, %v364
      %v387 = vpack.c.b16 %v369, %v367
      %v388 = vpack.c.b16 %v370, %v368
      %v389 = vpack.c.b16 %v373, %v371
      %v390 = vpack.c.b16 %v374, %v372
      %407 = vmatprep.subr.bf16.mxu0 %v376
      %408 = vmatpush1.bf16.msra.mxu0 %v375
      %409 = vmatprep.subr.bf16.mxu0 %v378
      %410 = vmatpush1.bf16.msra.mxu0 %v377
      %411 = vmatprep.subr.bf16.mxu0 %v380
      %412 = vmatpush1.bf16.msra.mxu0 %v379
      %413 = vmatprep.subr.bf16.mxu0 %v382
      %414 = vmatpush1.bf16.msra.mxu0 %v381
      %415 = vmatprep.subr.bf16.mxu0 %v384
      %416 = vmatpush1.bf16.msra.mxu0 %v383
      %417 = vmatprep.subr.bf16.mxu0 %v386
      %418 = vmatpush1.bf16.msra.mxu0 %v385
      %419 = vmatprep.subr.bf16.mxu0 %v388
      %420 = vmatpush1.bf16.msra.mxu0 %v387
      %421 = vmatprep.subr.bf16.mxu0 %v390
      %422 = vmatpush1.bf16.msra.mxu0 %v389
      %423 = vmatprep.subr.bf16.mxu0 0
      %424 = vmatpush1.bf16.msra.mxu0 0
      %425 = vmatprep.subr.bf16.mxu0 0
      %426 = vmatpush1.bf16.msra.mxu0 0
      %427 = vmatprep.subr.bf16.mxu0 0
      %428 = vmatpush1.bf16.msra.mxu0 0
      %429 = vmatprep.subr.bf16.mxu0 0
      %430 = vmatpush1.bf16.msra.mxu0 0
      %431 = vmatprep.subr.bf16.mxu0 0
      %432 = vmatpush1.bf16.msra.mxu0 0
      %433 = vmatprep.subr.bf16.mxu0 0
      %434 = vmatpush1.bf16.msra.mxu0 0
      %435 = vmatprep.subr.bf16.mxu0 0
      %436 = vmatpush1.bf16.msra.mxu0 0
      %437 = vmatprep.subr.bf16.mxu0 0
      %438 = vmatpush1.bf16.msra.mxu0 0
      %439 = vmatprep.mubr.bf16.mxu0 0
      %440 = vmatmul.mubr.bf16.gmra.mrb[0].mxu0 %v172
      %v441 = vpop.f32.mrb[0].mxu0
      %v442 = vadd.f32 0.0, %v441
      %v443 = vpop.f32.mrb[0].mxu0
      %v444 = vadd.f32 0.0, %v443
      %v445 = vpop.f32.mrb[0].mxu0
      %v446 = vpop.f32.mrb[0].mxu0
      %447 = vdwg.mxu0
      %v448 = vmax.f32 %v304, %v442
      %v449 = vmax.f32 %v306, %v444
      %s450 = scalar_lea.vmem %s165, 256
      %v451 = vld [vmem:[%s450] sm:$0xff]
      %v452 = vld [vmem:[%s450 + $0x8] sm:$0xff]
      %v453 = vld [vmem:[%s450 + $0x10] sm:$0xff]
      %v454 = vld [vmem:[%s450 + $0x18] sm:$0xff]
      %v455 = vld [vmem:[%s450 + $0x20] sm:$0xff]
      %v456 = vld [vmem:[%s450 + $0x28] sm:$0xff]
      %v457 = vld [vmem:[%s450 + $0x30] sm:$0xff]
      %v458 = vld [vmem:[%s450 + $0x38] sm:$0xff]
      %v459 = vld [vmem:[%s450 + $0x40] sm:$0xff]
      %v460 = vld [vmem:[%s450 + $0x48] sm:$0xff]
      %v461 = vld [vmem:[%s450 + $0x50] sm:$0xff]
      %v462 = vld [vmem:[%s450 + $0x58] sm:$0xff]
      %v463 = vld [vmem:[%s450 + $0x60] sm:$0xff]
      %v464 = vld [vmem:[%s450 + $0x68] sm:$0xff]
      %v465 = vld [vmem:[%s450 + $0x70] sm:$0xff]
      %v466 = vld [vmem:[%s450 + $0x78] sm:$0xff]
      %v483 = vunpack.c.l.b16 %v451
      %v484 = vunpack.c.h.b16 %v451
      %v485 = vunpack.c.l.b16 %v452
      %v486 = vunpack.c.h.b16 %v452
      %v487 = vunpack.c.l.b16 %v453
      %v488 = vunpack.c.h.b16 %v453
      %v489 = vunpack.c.l.b16 %v454
      %v490 = vunpack.c.h.b16 %v454
      %v491 = vunpack.c.l.b16 %v455
      %v492 = vunpack.c.h.b16 %v455
      %v493 = vunpack.c.l.b16 %v456
      %v494 = vunpack.c.h.b16 %v456
      %v495 = vunpack.c.l.b16 %v457
      %v496 = vunpack.c.h.b16 %v457
      %v497 = vunpack.c.l.b16 %v458
      %v498 = vunpack.c.h.b16 %v458
      %v499 = vunpack.c.l.b16 %v459
      %v500 = vunpack.c.h.b16 %v459
      %v501 = vunpack.c.l.b16 %v460
      %v502 = vunpack.c.h.b16 %v460
      %v503 = vunpack.c.l.b16 %v461
      %v504 = vunpack.c.h.b16 %v461
      %v505 = vunpack.c.l.b16 %v462
      %v506 = vunpack.c.h.b16 %v462
      %v507 = vunpack.c.l.b16 %v463
      %v508 = vunpack.c.h.b16 %v463
      %v509 = vunpack.c.l.b16 %v464
      %v510 = vunpack.c.h.b16 %v464
      %v511 = vunpack.c.l.b16 %v465
      %v512 = vunpack.c.h.b16 %v465
      %v513 = vunpack.c.l.b16 %v466
      %v514 = vunpack.c.h.b16 %v466
      %v515 = vpack.c.b16 %v485, %v483
      %v516 = vpack.c.b16 %v486, %v484
      %v517 = vpack.c.b16 %v489, %v487
      %v518 = vpack.c.b16 %v490, %v488
      %v519 = vpack.c.b16 %v493, %v491
      %v520 = vpack.c.b16 %v494, %v492
      %v521 = vpack.c.b16 %v497, %v495
      %v522 = vpack.c.b16 %v498, %v496
      %v523 = vpack.c.b16 %v501, %v499
      %v524 = vpack.c.b16 %v502, %v500
      %v525 = vpack.c.b16 %v505, %v503
      %v526 = vpack.c.b16 %v506, %v504
      %v527 = vpack.c.b16 %v509, %v507
      %v528 = vpack.c.b16 %v510, %v508
      %v529 = vpack.c.b16 %v513, %v511
      %v530 = vpack.c.b16 %v514, %v512
      %547 = vmatprep.subr.bf16.mxu0 %v516
      %548 = vmatpush1.bf16.msra.mxu0 %v515
      %549 = vmatprep.subr.bf16.mxu0 %v518
      %550 = vmatpush1.bf16.msra.mxu0 %v517
      %551 = vmatprep.subr.bf16.mxu0 %v520
      %552 = vmatpush1.bf16.msra.mxu0 %v519
      %553 = vmatprep.subr.bf16.mxu0 %v522
      %554 = vmatpush1.bf16.msra.mxu0 %v521
      %555 = vmatprep.subr.bf16.mxu0 %v524
      %556 = vmatpush1.bf16.msra.mxu0 %v523
      %557 = vmatprep.subr.bf16.mxu0 %v526
      %558 = vmatpush1.bf16.msra.mxu0 %v525
      %559 = vmatprep.subr.bf16.mxu0 %v528
      %560 = vmatpush1.bf16.msra.mxu0 %v527
      %561 = vmatprep.subr.bf16.mxu0 %v530
      %562 = vmatpush1.bf16.msra.mxu0 %v529
      %563 = vmatprep.subr.bf16.mxu0 0
      %564 = vmatpush1.bf16.msra.mxu0 0
      %565 = vmatprep.subr.bf16.mxu0 0
      %566 = vmatpush1.bf16.msra.mxu0 0
      %567 = vmatprep.subr.bf16.mxu0 0
      %568 = vmatpush1.bf16.msra.mxu0 0
      %569 = vmatprep.subr.bf16.mxu0 0
      %570 = vmatpush1.bf16.msra.mxu0 0
      %571 = vmatprep.subr.bf16.mxu0 0
      %572 = vmatpush1.bf16.msra.mxu0 0
      %573 = vmatprep.subr.bf16.mxu0 0
      %574 = vmatpush1.bf16.msra.mxu0 0
      %575 = vmatprep.subr.bf16.mxu0 0
      %576 = vmatpush1.bf16.msra.mxu0 0
      %577 = vmatprep.subr.bf16.mxu0 0
      %578 = vmatpush1.bf16.msra.mxu0 0
      %579 = vmatprep.mubr.bf16.mxu0 0
      %580 = vmatmul.mubr.bf16.gmra.mrb[0].mxu0 %v172
      %v581 = vpop.f32.mrb[0].mxu0
      %v582 = vadd.f32 0.0, %v581
      %v583 = vpop.f32.mrb[0].mxu0
      %v584 = vadd.f32 0.0, %v583
      %v585 = vpop.f32.mrb[0].mxu0
      %v586 = vpop.f32.mrb[0].mxu0
      %587 = vdwg.mxu0
      %v588 = vmax.f32 %v448, %v582
      %v589 = vmax.f32 %v449, %v584
      %s590 = scalar_lea.vmem %s165, 384
      %v591 = vld [vmem:[%s590] sm:$0xff]
      %v592 = vld [vmem:[%s590 + $0x8] sm:$0xff]
      %v593 = vld [vmem:[%s590 + $0x10] sm:$0xff]
      %v594 = vld [vmem:[%s590 + $0x18] sm:$0xff]
      %v595 = vld [vmem:[%s590 + $0x20] sm:$0xff]
      %v596 = vld [vmem:[%s590 + $0x28] sm:$0xff]
      %v597 = vld [vmem:[%s590 + $0x30] sm:$0xff]
      %v598 = vld [vmem:[%s590 + $0x38] sm:$0xff]
      %v599 = vld [vmem:[%s590 + $0x40] sm:$0xff]
      %v600 = vld [vmem:[%s590 + $0x48] sm:$0xff]
      %v601 = vld [vmem:[%s590 + $0x50] sm:$0xff]
      %v602 = vld [vmem:[%s590 + $0x58] sm:$0xff]
      %v603 = vld [vmem:[%s590 + $0x60] sm:$0xff]
      %v604 = vld [vmem:[%s590 + $0x68] sm:$0xff]
      %v605 = vld [vmem:[%s590 + $0x70] sm:$0xff]
      %v606 = vld [vmem:[%s590 + $0x78] sm:$0xff]
      %v623 = vunpack.c.l.b16 %v591
      %v624 = vunpack.c.h.b16 %v591
      %v625 = vunpack.c.l.b16 %v592
      %v626 = vunpack.c.h.b16 %v592
      %v627 = vunpack.c.l.b16 %v593
      %v628 = vunpack.c.h.b16 %v593
      %v629 = vunpack.c.l.b16 %v594
      %v630 = vunpack.c.h.b16 %v594
      %v631 = vunpack.c.l.b16 %v595
      %v632 = vunpack.c.h.b16 %v595
      %v633 = vunpack.c.l.b16 %v596
      %v634 = vunpack.c.h.b16 %v596
      %v635 = vunpack.c.l.b16 %v597
      %v636 = vunpack.c.h.b16 %v597
      %v637 = vunpack.c.l.b16 %v598
      %v638 = vunpack.c.h.b16 %v598
      %v639 = vunpack.c.l.b16 %v599
      %v640 = vunpack.c.h.b16 %v599
      %v641 = vunpack.c.l.b16 %v600
      %v642 = vunpack.c.h.b16 %v600
      %v643 = vunpack.c.l.b16 %v601
      %v644 = vunpack.c.h.b16 %v601
      %v645 = vunpack.c.l.b16 %v602
      %v646 = vunpack.c.h.b16 %v602
      %v647 = vunpack.c.l.b16 %v603
      %v648 = vunpack.c.h.b16 %v603
      %v649 = vunpack.c.l.b16 %v604
      %v650 = vunpack.c.h.b16 %v604
      %v651 = vunpack.c.l.b16 %v605
      %v652 = vunpack.c.h.b16 %v605
      %v653 = vunpack.c.l.b16 %v606
      %v654 = vunpack.c.h.b16 %v606
      %v655 = vpack.c.b16 %v625, %v623
      %v656 = vpack.c.b16 %v626, %v624
      %v657 = vpack.c.b16 %v629, %v627
      %v658 = vpack.c.b16 %v630, %v628
      %v659 = vpack.c.b16 %v633, %v631
      %v660 = vpack.c.b16 %v634, %v632
      %v661 = vpack.c.b16 %v637, %v635
      %v662 = vpack.c.b16 %v638, %v636
      %v663 = vpack.c.b16 %v641, %v639
      %v664 = vpack.c.b16 %v642, %v640
      %v665 = vpack.c.b16 %v645, %v643
      %v666 = vpack.c.b16 %v646, %v644
      %v667 = vpack.c.b16 %v649, %v647
      %v668 = vpack.c.b16 %v650, %v648
      %v669 = vpack.c.b16 %v653, %v651
      %v670 = vpack.c.b16 %v654, %v652
      %687 = vmatprep.subr.bf16.mxu0 %v656
      %688 = vmatpush1.bf16.msra.mxu0 %v655
      %689 = vmatprep.subr.bf16.mxu0 %v658
      %690 = vmatpush1.bf16.msra.mxu0 %v657
      %691 = vmatprep.subr.bf16.mxu0 %v660
      %692 = vmatpush1.bf16.msra.mxu0 %v659
      %693 = vmatprep.subr.bf16.mxu0 %v662
      %694 = vmatpush1.bf16.msra.mxu0 %v661
      %695 = vmatprep.subr.bf16.mxu0 %v664
      %696 = vmatpush1.bf16.msra.mxu0 %v663
      %697 = vmatprep.subr.bf16.mxu0 %v666
      %698 = vmatpush1.bf16.msra.mxu0 %v665
      %699 = vmatprep.subr.bf16.mxu0 %v668
      %700 = vmatpush1.bf16.msra.mxu0 %v667
      %701 = vmatprep.subr.bf16.mxu0 %v670
      %702 = vmatpush1.bf16.msra.mxu0 %v669
      %703 = vmatprep.subr.bf16.mxu0 0
      %704 = vmatpush1.bf16.msra.mxu0 0
      %705 = vmatprep.subr.bf16.mxu0 0
      %706 = vmatpush1.bf16.msra.mxu0 0
      %707 = vmatprep.subr.bf16.mxu0 0
      %708 = vmatpush1.bf16.msra.mxu0 0
      %709 = vmatprep.subr.bf16.mxu0 0
      %710 = vmatpush1.bf16.msra.mxu0 0
      %711 = vmatprep.subr.bf16.mxu0 0
      %712 = vmatpush1.bf16.msra.mxu0 0
      %713 = vmatprep.subr.bf16.mxu0 0
      %714 = vmatpush1.bf16.msra.mxu0 0
      %715 = vmatprep.subr.bf16.mxu0 0
      %716 = vmatpush1.bf16.msra.mxu0 0
      %717 = vmatprep.subr.bf16.mxu0 0
      %718 = vmatpush1.bf16.msra.mxu0 0
      %719 = vmatprep.mubr.bf16.mxu0 0
      %720 = vmatmul.mubr.bf16.gmra.mrb[0].mxu0 %v172
      %v721 = vpop.f32.mrb[0].mxu0
      %v722 = vadd.f32 0.0, %v721
      %v723 = vpop.f32.mrb[0].mxu0
      %v724 = vadd.f32 0.0, %v723
      %v725 = vpop.f32.mrb[0].mxu0
      %v726 = vpop.f32.mrb[0].mxu0
      %727 = vdwg.mxu0
      %v728 = vmax.f32 %v588, %v722
      %v729 = vmax.f32 %v589, %v724
      %v730 = vld [vmem:[%s2] sm:$0x3f]
      %732 = vset.pattern.permute.xlu0 0
      %733 = vperm.xlu0 %732, %v730
      %v734 = vpop.permute.xlu0 %733
      %v736 = vadd.f32 %v728, %v734
      %v737 = vadd.f32 %v729, %v734
      %v738 = vmax.f32 %v736, 0.0
      %v739 = vmax.f32 %v737, 0.0
      %740 = vst [vmem:[%s170] sm:$0x3f] %v738
      %vm741 = vcmask 553984
      %742 = vst.msk [vmem:[%s170 + $0x8] sm:$0x3f] %vm741, %v739
      %p743 = scmp.lt.s32.totalorder %s14, 1
      %s744 = scalar_select %p743, %s14, 1
      %s745 = smul.addr %s744, 2
      %s746 = smul.addr %s745, 8
      %s747 = scalar_lea.vmem %s3, %s746
      // Predicated region
      $region33: #{cnn_forward.3} parent=31 // pred_check
        %p748 = pneg %p100
      $region34: #{cnn_forward.3} parent=31 // pred_check_branch
        %750 = sbr.rel (%p748) target = $region36
      $region35: #{cnn_forward.3} parent=31 // pred_region
        _
      $region36: #{cnn_forward.3} parent=31 // pred_fallthru
        _
    $region32: #{cnn_forward.3} parent=5 // pred_fallthru
      _
    %p751 = scmp.le.s32.totalorder 2, %s9
    // Predicated region
    $region37: #{cnn_forward.3} parent=5 // pred_check
      %p752 = pneg %p751
    $region38: #{cnn_forward.3} parent=5 // pred_check_branch
      %754 = sbr.rel (%p752) target = $region40
    $region39: #{cnn_forward.3} parent=5 // pred_region
      %s755 = ssub.s32 %s9, 2
      // Predicated region
      $region41: #{cnn_forward.3} parent=39 // pred_check
        %p756 = pneg %p106
      $region42: #{cnn_forward.3} parent=39 // pred_check_branch
        %758 = sbr.rel (%p756) target = $region44
      $region43: #{cnn_forward.3} parent=39 // pred_region
        %p759 = scmp.lt.s32.totalorder %s15, 1
        %s760 = scalar_select %p759, %s15, 1
        %s761 = smul.addr %s760, 2
        %s762 = smul.addr %s761, 8
        %s763 = scalar_lea.vmem %s3, %s762
      $region44: #{cnn_forward.3} parent=39 // pred_fallthru
        _
    $region40: #{cnn_forward.3} parent=5 // pred_fallthru
      _
  $region6: #{cnn_forward.3} parent=0 // loop_footer
    %s13 = sadd.s32 1, %s9
  $region7: #{cnn_forward.3} parent=0 // loop_footer_branch
    %8 = sbr.rel target = $region3
  $region8: #{cnn_forward.3} parent=0 // loop_exit
    _

// kernel: cnn_forward.4
$region0: #{cnn_forward.4}
  #allocation0 [shape = 'u32[]', space=smem, size = 0x4, offset = 0x4, fixed_abs, tag = 'smem constant byte address 0x4 - core index']
  #allocation1 [shape = 'u32[144,128]{1,0:T(1,128)}', space=vmem, size = 0x12000, scoped, tag = 'internal scratch']
  %s0 = inlined_call_operand.vmem [shape: bf16[2,4,256,25], index: 0, kind: input, shape index: {}]
  %s1 = inlined_call_operand.vmem [shape: bf16[16,256], index: 1, kind: input, shape index: {}]
  %s2 = inlined_call_operand.vmem [shape: f32[16,1], index: 2, kind: input, shape index: {}]
  %s3 = inlined_call_operand.vmem [shape: f32[2,16,25], index: 3, kind: output, shape index: {}]
  %s4 = sld [smem:[#allocation0]]
  $region45: #{cnn_forward.4} parent=0
    _
  %s6 = ssub.s32 1, %s4
  %s7 = scalar_select 0, %s6, %s4
  loop: start=0, step=1, limit=4
  $region2: #{cnn_forward.4} parent=0 // loop_pre_header
    _
  $region3: #{cnn_forward.4} parent=0 // loop_header
    %s9 = sphi 0, %s13
    %p10 = scmp.ge.s32.totalorder %s9, 4
    %s19 = sphi 0, %s21
    %s22 = sphi 0, %s19
    %s23 = sphi 0, %s22
    %s39 = sphi 0, %s23
    %s43 = sphi 0, %s43
    %s45 = sphi 0, %s43
    %s46 = sphi 0, %s45
    %s60 = sphi 0, %s46
    %s64 = sphi 0, %s64
    %s66 = sphi 0, %s64
    %s67 = sphi 0, %s66
    %s81 = sphi 0, %s67
    %s87 = sphi 0, %s89
    %s90 = sphi 0, %s87
    %s91 = sphi 0, %s90
    %s107 = sphi 0, %s91
  $region4: #{cnn_forward.4} parent=0 // loop_header_branch
    %12 = sbr.rel (%p10) target = $region8
  $region5: #{cnn_forward.4} parent=0 // loop_body
    %s14 = ssub.s32 %s9, 1
    %s15 = ssub.s32 %s9, 2
    %s16 = sadd.s32 %s9, 1
    %s17 = ssub.s32 %s9, %s16
    %p18 = scmp.eq.s32.totalorder %s17, 0
    %s20 = sadd.s32 %s19, 1
    %s21 = scalar_select %p18, %s19, %s20
    %p24 = pneg %p18
    %p25 = scmp.eq.s32.totalorder %s9, 1
    %p26 = por %p24, %p25
    %p27 = scmp.ne.s32.totalorder %s19, %s22
    %p28 = scmp.eq.s32.totalorder %s9, 0
    %p29 = por %p27, %p28
    %p30 = scmp.ne.s32.totalorder %s19, %s22
    %p31 = scmp.eq.s32.totalorder %s14, 1
    %p32 = por %p30, %p31
    %p33 = scmp.ne.s32.totalorder %s22, %s23
    %p34 = scmp.eq.s32.totalorder %s14, 0
    %p35 = por %p33, %p34
    %p36 = scmp.ne.s32.totalorder %s22, %s23
    %p37 = scmp.eq.s32.totalorder %s15, 1
    %p38 = por %p36, %p37
    %p40 = scmp.ne.s32.totalorder %s23, %s39
    %p41 = scmp.eq.s32.totalorder %s15, 0
    %p42 = por %p40, %p41
    %s44 = sadd.s32 %s43, 1
    %p47 = scmp.eq.s32.totalorder %s9, 1
    %p48 = scmp.ne.s32.totalorder %s43, %s45
    %p49 = scmp.eq.s32.totalorder %s9, 0
    %p50 = por %p48, %p49
    %p51 = scmp.ne.s32.totalorder %s43, %s45
    %p52 = scmp.eq.s32.totalorder %s14, 1
    %p53 = por %p51, %p52
    %p54 = scmp.ne.s32.totalorder %s45, %s46
    %p55 = scmp.eq.s32.totalorder %s14, 0
    %p56 = por %p54, %p55
    %p57 = scmp.ne.s32.totalorder %s45, %s46
    %p58 = scmp.eq.s32.totalorder %s15, 1
    %p59 = por %p57, %p58
    %p61 = scmp.ne.s32.totalorder %s46, %s60
    %p62 = scmp.eq.s32.totalorder %s15, 0
    %p63 = por %p61, %p62
    %s65 = sadd.s32 %s64, 1
    %p68 = scmp.eq.s32.totalorder %s9, 1
    %p69 = scmp.ne.s32.totalorder %s64, %s66
    %p70 = scmp.eq.s32.totalorder %s9, 0
    %p71 = por %p69, %p70
    %p72 = scmp.ne.s32.totalorder %s64, %s66
    %p73 = scmp.eq.s32.totalorder %s14, 1
    %p74 = por %p72, %p73
    %p75 = scmp.ne.s32.totalorder %s66, %s67
    %p76 = scmp.eq.s32.totalorder %s14, 0
    %p77 = por %p75, %p76
    %p78 = scmp.ne.s32.totalorder %s66, %s67
    %p79 = scmp.eq.s32.totalorder %s15, 1
    %p80 = por %p78, %p79
    %p82 = scmp.ne.s32.totalorder %s67, %s81
    %p83 = scmp.eq.s32.totalorder %s15, 0
    %p84 = por %p82, %p83
    %s85 = ssub.s32 %s9, %s16
    %p86 = scmp.eq.s32.totalorder %s85, 0
    %s88 = sadd.s32 %s87, 1
    %s89 = scalar_select %p86, %s87, %s88
    %p92 = pneg %p86
    %p93 = scmp.eq.s32.totalorder %s9, 1
    %p94 = por %p92, %p93
    %p95 = scmp.ne.s32.totalorder %s87, %s90
    %p96 = scmp.eq.s32.totalorder %s9, 0
    %p97 = por %p95, %p96
    %p98 = scmp.ne.s32.totalorder %s87, %s90
    %p99 = scmp.eq.s32.totalorder %s14, 1
    %p100 = por %p98, %p99
    %p101 = scmp.ne.s32.totalorder %s90, %s91
    %p102 = scmp.eq.s32.totalorder %s14, 0
    %p103 = por %p101, %p102
    %p104 = scmp.ne.s32.totalorder %s90, %s91
    %p105 = scmp.eq.s32.totalorder %s15, 1
    %p106 = por %p104, %p105
    %p108 = scmp.ne.s32.totalorder %s91, %s107
    %p109 = scmp.eq.s32.totalorder %s15, 0
    %p110 = por %p108, %p109
    %p111 = scmp.le.s32.totalorder 1, %s9
    %p112 = scmp.lt.s32.totalorder %s9, 3
    %p113 = pnand %p111, %p112
    %p114 = pneg %p113
    // Predicated region
    $region9: #{cnn_forward.4} parent=5 // pred_check
      _
    $region10: #{cnn_forward.4} parent=5 // pred_check_branch
      %116 = sbr.rel (%p113) target = $region12
    $region11: #{cnn_forward.4} parent=5 // pred_region
      %s117 = ssub.s32 %s9, 1
      // Predicated region
      $region13: #{cnn_forward.4} parent=11 // pred_check
        %p118 = pneg %p56
      $region14: #{cnn_forward.4} parent=11 // pred_check_branch
        %120 = sbr.rel (%p118) target = $region16
      $region15: #{cnn_forward.4} parent=11 // pred_region
        _
      $region16: #{cnn_forward.4} parent=11 // pred_fallthru
        _
      // Predicated region
      $region17: #{cnn_forward.4} parent=11 // pred_check
        %p121 = pneg %p77
      $region18: #{cnn_forward.4} parent=11 // pred_check_branch
        %123 = sbr.rel (%p121) target = $region20
      $region19: #{cnn_forward.4} parent=11 // pred_region
        _
      $region20: #{cnn_forward.4} parent=11 // pred_fallthru
        _
    $region12: #{cnn_forward.4} parent=5 // pred_fallthru
      _
    %p124 = scmp.lt.s32.totalorder %s9, 2
    // Predicated region
    $region21: #{cnn_forward.4} parent=5 // pred_check
      %p125 = pneg %p124
    $region22: #{cnn_forward.4} parent=5 // pred_check_branch
      %127 = sbr.rel (%p125) target = $region24
    $region23: #{cnn_forward.4} parent=5 // pred_region
      // Predicated region
      $region25: #{cnn_forward.4} parent=23 // pred_check
        %p128 = pneg %p29
      $region26: #{cnn_forward.4} parent=23 // pred_check_branch
        %130 = sbr.rel (%p128) target = $region28
      $region27: #{cnn_forward.4} parent=23 // pred_region
        %p131 = scmp.lt.s32.totalorder %s9, 1
        %s132 = scalar_select %p131, %s9, 1
        %s133 = smul.addr %s132, 128
        %s134 = smul.addr %s133, 4
        %s135 = scalar_lea.vmem %s0, %s134
      $region28: #{cnn_forward.4} parent=23 // pred_fallthru
        _
    $region24: #{cnn_forward.4} parent=5 // pred_fallthru
      _
    %p136 = scmp.le.s32.totalorder 1, %s9
    %p137 = scmp.lt.s32.totalorder %s9, 3
    %p138 = pnand %p136, %p137
    %p139 = pneg %p138
    // Predicated region
    $region29: #{cnn_forward.4} parent=5 // pred_check
      _
    $region30: #{cnn_forward.4} parent=5 // pred_check_branch
      %141 = sbr.rel (%p138) target = $region32
    $region31: #{cnn_forward.4} parent=5 // pred_region
      %s142 = ssub.s32 %s9, 1
      %p143 = scmp.lt.s32.totalorder %s14, 1
      %s144 = scalar_select %p143, %s14, 1
      %s145 = smul.addr %s144, 128
      %s146 = smul.addr %s145, 4
      %s147 = scalar_lea.vmem %s0, %s146
      %p148 = pneg %p35
      %p149 = pneg %p32
      %p150 = pneg %p56
      %p151 = pneg %p53
      %p152 = pneg %p77
      %p153 = pneg %p74
      %p154 = pneg %p103
      %p155 = pneg %p100
      %p156 = scmp.lt.s32.totalorder %s14, 1
      %s157 = scalar_select %p156, %s14, 1
      %s158 = smul.addr %s157, 2
      %s159 = smul.addr %s158, 8
      %s160 = scalar_lea.vmem %s3, %s159
      %p161 = scmp.lt.s32.totalorder %s14, 1
      %s162 = scalar_select %p161, %s14, 1
      %s163 = smul.addr %s162, 128
      %s164 = smul.addr %s163, 4
      %s165 = scalar_lea.vmem %s0, %s164
      %p166 = scmp.lt.s32.totalorder %s14, 1
      %s167 = scalar_select %p166, %s14, 1
      %s168 = smul.addr %s167, 2
      %s169 = smul.addr %s168, 8
      %s170 = scalar_lea.vmem %s3, %s169
      %v172 = vld [vmem:[%s1] sm:$0xff]
      %v173 = vld [vmem:[%s1 + $0x8] sm:$0xff]
      %v174 = vld [vmem:[%s165] sm:$0xf]
      %v175 = vld [vmem:[%s165 + $0x4] sm:$0xf]
      %v176 = vld [vmem:[%s165 + $0x8] sm:$0xf]
      %v177 = vld [vmem:[%s165 + $0xc] sm:$0xf]
      %v178 = vld [vmem:[%s165 + $0x10] sm:$0xf]
      %v179 = vld [vmem:[%s165 + $0x14] sm:$0xf]
      %v180 = vld [vmem:[%s165 + $0x18] sm:$0xf]
      %v181 = vld [vmem:[%s165 + $0x1c] sm:$0xf]
      %v182 = vld [vmem:[%s165 + $0x20] sm:$0xf]
      %v183 = vld [vmem:[%s165 + $0x24] sm:$0xf]
      %v184 = vld [vmem:[%s165 + $0x28] sm:$0xf]
      %v185 = vld [vmem:[%s165 + $0x2c] sm:$0xf]
      %v186 = vld [vmem:[%s165 + $0x30] sm:$0xf]
      %v187 = vld [vmem:[%s165 + $0x34] sm:$0xf]
      %v188 = vld [vmem:[%s165 + $0x38] sm:$0xf]
      %v189 = vld [vmem:[%s165 + $0x3c] sm:$0xf]
      %v190 = vld [vmem:[%s165 + $0x40] sm:$0xf]
      %v191 = vld [vmem:[%s165 + $0x44] sm:$0xf]
      %v192 = vld [vmem:[%s165 + $0x48] sm:$0xf]
      %v193 = vld [vmem:[%s165 + $0x4c] sm:$0xf]
      %v194 = vld [vmem:[%s165 + $0x50] sm:$0xf]
      %v195 = vld [vmem:[%s165 + $0x54] sm:$0xf]
      %v196 = vld [vmem:[%s165 + $0x58] sm:$0xf]
      %v197 = vld [vmem:[%s165 + $0x5c] sm:$0xf]
      %v198 = vld [vmem:[%s165 + $0x60] sm:$0xf]
      %v199 = vld [vmem:[%s165 + $0x64] sm:$0xf]
      %v200 = vld [vmem:[%s165 + $0x68] sm:$0xf]
      %v201 = vld [vmem:[%s165 + $0x6c] sm:$0xf]
      %v202 = vld [vmem:[%s165 + $0x70] sm:$0xf]
      %v203 = vld [vmem:[%s165 + $0x74] sm:$0xf]
      %v204 = vld [vmem:[%s165 + $0x78] sm:$0xf]
      %v205 = vld [vmem:[%s165 + $0x7c] sm:$0xf]
      %v208 = vunpack.c.l.b16 %v172
      %v209 = vunpack.c.h.b16 %v172
      %v210 = vunpack.c.l.b16 %v173
      %v211 = vunpack.c.h.b16 %v173
      %v212 = vpack.c.b16 %v210, %v208
      %v213 = vpack.c.b16 %v211, %v209
      %v248 = vunpack.c.l.b16 %v174
      %v249 = vunpack.c.l.b16 %v175
      %v250 = vunpack.c.l.b16 %v176
      %v251 = vunpack.c.l.b16 %v177
      %v252 = vunpack.c.l.b16 %v178
      %v253 = vunpack.c.l.b16 %v179
      %v254 = vunpack.c.l.b16 %v180
      %v255 = vunpack.c.l.b16 %v181
      %v256 = vunpack.c.l.b16 %v182
      %v257 = vunpack.c.l.b16 %v183
      %v258 = vunpack.c.l.b16 %v184
      %v259 = vunpack.c.l.b16 %v185
      %v260 = vunpack.c.l.b16 %v186
      %v261 = vunpack.c.l.b16 %v187
      %v262 = vunpack.c.l.b16 %v188
      %v263 = vunpack.c.l.b16 %v189
      %v264 = vunpack.c.l.b16 %v190
      %v265 = vunpack.c.l.b16 %v191
      %v266 = vunpack.c.l.b16 %v192
      %v267 = vunpack.c.l.b16 %v193
      %v268 = vunpack.c.l.b16 %v194
      %v269 = vunpack.c.l.b16 %v195
      %v270 = vunpack.c.l.b16 %v196
      %v271 = vunpack.c.l.b16 %v197
      %v272 = vunpack.c.l.b16 %v198
      %v273 = vunpack.c.l.b16 %v199
      %v274 = vunpack.c.l.b16 %v200
      %v275 = vunpack.c.l.b16 %v201
      %v276 = vunpack.c.l.b16 %v202
      %v277 = vunpack.c.l.b16 %v203
      %v278 = vunpack.c.l.b16 %v204
      %v279 = vunpack.c.l.b16 %v205
      %v280 = vpack.c.b16 %v249, %v248
      %v281 = vpack.c.b16 %v251, %v250
      %v282 = vpack.c.b16 %v253, %v252
      %v283 = vpack.c.b16 %v255, %v254
      %v284 = vpack.c.b16 %v257, %v256
      %v285 = vpack.c.b16 %v259, %v258
      %v286 = vpack.c.b16 %v261, %v260
      %v287 = vpack.c.b16 %v263, %v262
      %v288 = vpack.c.b16 %v265, %v264
      %v289 = vpack.c.b16 %v267, %v266
      %v290 = vpack.c.b16 %v269, %v268
      %v291 = vpack.c.b16 %v271, %v270
      %v292 = vpack.c.b16 %v273, %v272
      %v293 = vpack.c.b16 %v275, %v274
      %v294 = vpack.c.b16 %v277, %v276
      %v295 = vpack.c.b16 %v279, %v278
      %312 = vmatprep.subr.bf16.mxu0 0
      %313 = vmatpush1.bf16.msra.mxu0 %v280
      %314 = vmatprep.subr.bf16.mxu0 0
      %315 = vmatpush1.bf16.msra.mxu0 %v281
      %316 = vmatprep.subr.bf16.mxu0 0
      %317 = vmatpush1.bf16.msra.mxu0 %v282
      %318 = vmatprep.subr.bf16.mxu0 0
      %319 = vmatpush1.bf16.msra.mxu0 %v283
      %320 = vmatprep.subr.bf16.mxu0 0
      %321 = vmatpush1.bf16.msra.mxu0 %v284
      %322 = vmatprep.subr.bf16.mxu0 0
      %323 = vmatpush1.bf16.msra.mxu0 %v285
      %324 = vmatprep.subr.bf16.mxu0 0
      %325 = vmatpush1.bf16.msra.mxu0 %v286
      %326 = vmatprep.subr.bf16.mxu0 0
      %327 = vmatpush1.bf16.msra.mxu0 %v287
      %328 = vmatprep.subr.bf16.mxu0 0
      %329 = vmatpush1.bf16.msra.mxu0 %v288
      %330 = vmatprep.subr.bf16.mxu0 0
      %331 = vmatpush1.bf16.msra.mxu0 %v289
      %332 = vmatprep.subr.bf16.mxu0 0
      %333 = vmatpush1.bf16.msra.mxu0 %v290
      %334 = vmatprep.subr.bf16.mxu0 0
      %335 = vmatpush1.bf16.msra.mxu0 %v291
      %336 = vmatprep.subr.bf16.mxu0 0
      %337 = vmatpush1.bf16.msra.mxu0 %v292
      %338 = vmatprep.subr.bf16.mxu0 0
      %339 = vmatpush1.bf16.msra.mxu0 %v293
      %340 = vmatprep.subr.bf16.mxu0 0
      %341 = vmatpush1.bf16.msra.mxu0 %v294
      %342 = vmatprep.subr.bf16.mxu0 0
      %343 = vmatpush1.bf16.msra.mxu0 %v295
      %344 = vmatprep.mubr.bf16.mxu0 %v213
      %345 = vmatmul.mubr.bf16.gmra.mrb[0].mxu0 %v212
      %v346 = vpop.f32.mrb[0].mxu0
      %v347 = vadd.f32 0.0, %v346
      %v348 = vpop.f32.mrb[0].mxu0
      %v349 = vpop.f32.mrb[0].mxu0
      %v350 = vadd.f32 0.0, %v349
      %v351 = vpop.f32.mrb[0].mxu0
      %352 = vdwg.mxu0
      %s353 = scalar_lea.vmem %s165, 128
      %v354 = vld [vmem:[%s353] sm:$0xf]
      %v355 = vld [vmem:[%s353 + $0x4] sm:$0xf]
      %v356 = vld [vmem:[%s353 + $0x8] sm:$0xf]
      %v357 = vld [vmem:[%s353 + $0xc] sm:$0xf]
      %v358 = vld [vmem:[%s353 + $0x10] sm:$0xf]
      %v359 = vld [vmem:[%s353 + $0x14] sm:$0xf]
      %v360 = vld [vmem:[%s353 + $0x18] sm:$0xf]
      %v361 = vld [vmem:[%s353 + $0x1c] sm:$0xf]
      %v362 = vld [vmem:[%s353 + $0x20] sm:$0xf]
      %v363 = vld [vmem:[%s353 + $0x24] sm:$0xf]
      %v364 = vld [vmem:[%s353 + $0x28] sm:$0xf]
      %v365 = vld [vmem:[%s353 + $0x2c] sm:$0xf]
      %v366 = vld [vmem:[%s353 + $0x30] sm:$0xf]
      %v367 = vld [vmem:[%s353 + $0x34] sm:$0xf]
      %v368 = vld [vmem:[%s353 + $0x38] sm:$0xf]
      %v369 = vld [vmem:[%s353 + $0x3c] sm:$0xf]
      %v370 = vld [vmem:[%s353 + $0x40] sm:$0xf]
      %v371 = vld [vmem:[%s353 + $0x44] sm:$0xf]
      %v372 = vld [vmem:[%s353 + $0x48] sm:$0xf]
      %v373 = vld [vmem:[%s353 + $0x4c] sm:$0xf]
      %v374 = vld [vmem:[%s353 + $0x50] sm:$0xf]
      %v375 = vld [vmem:[%s353 + $0x54] sm:$0xf]
      %v376 = vld [vmem:[%s353 + $0x58] sm:$0xf]
      %v377 = vld [vmem:[%s353 + $0x5c] sm:$0xf]
      %v378 = vld [vmem:[%s353 + $0x60] sm:$0xf]
      %v379 = vld [vmem:[%s353 + $0x64] sm:$0xf]
      %v380 = vld [vmem:[%s353 + $0x68] sm:$0xf]
      %v381 = vld [vmem:[%s353 + $0x6c] sm:$0xf]
      %v382 = vld [vmem:[%s353 + $0x70] sm:$0xf]
      %v383 = vld [vmem:[%s353 + $0x74] sm:$0xf]
      %v384 = vld [vmem:[%s353 + $0x78] sm:$0xf]
      %v385 = vld [vmem:[%s353 + $0x7c] sm:$0xf]
      %v418 = vunpack.c.l.b16 %v354
      %v419 = vunpack.c.l.b16 %v355
      %v420 = vunpack.c.l.b16 %v356
      %v421 = vunpack.c.l.b16 %v357
      %v422 = vunpack.c.l.b16 %v358
      %v423 = vunpack.c.l.b16 %v359
      %v424 = vunpack.c.l.b16 %v360
      %v425 = vunpack.c.l.b16 %v361
      %v426 = vunpack.c.l.b16 %v362
      %v427 = vunpack.c.l.b16 %v363
      %v428 = vunpack.c.l.b16 %v364
      %v429 = vunpack.c.l.b16 %v365
      %v430 = vunpack.c.l.b16 %v366
      %v431 = vunpack.c.l.b16 %v367
      %v432 = vunpack.c.l.b16 %v368
      %v433 = vunpack.c.l.b16 %v369
      %v434 = vunpack.c.l.b16 %v370
      %v435 = vunpack.c.l.b16 %v371
      %v436 = vunpack.c.l.b16 %v372
      %v437 = vunpack.c.l.b16 %v373
      %v438 = vunpack.c.l.b16 %v374
      %v439 = vunpack.c.l.b16 %v375
      %v440 = vunpack.c.l.b16 %v376
      %v441 = vunpack.c.l.b16 %v377
      %v442 = vunpack.c.l.b16 %v378
      %v443 = vunpack.c.l.b16 %v379
      %v444 = vunpack.c.l.b16 %v380
      %v445 = vunpack.c.l.b16 %v381
      %v446 = vunpack.c.l.b16 %v382
      %v447 = vunpack.c.l.b16 %v383
      %v448 = vunpack.c.l.b16 %v384
      %v449 = vunpack.c.l.b16 %v385
      %v450 = vpack.c.b16 %v419, %v418
      %v451 = vpack.c.b16 %v421, %v420
      %v452 = vpack.c.b16 %v423, %v422
      %v453 = vpack.c.b16 %v425, %v424
      %v454 = vpack.c.b16 %v427, %v426
      %v455 = vpack.c.b16 %v429, %v428
      %v456 = vpack.c.b16 %v431, %v430
      %v457 = vpack.c.b16 %v433, %v432
      %v458 = vpack.c.b16 %v435, %v434
      %v459 = vpack.c.b16 %v437, %v436
      %v460 = vpack.c.b16 %v439, %v438
      %v461 = vpack.c.b16 %v441, %v440
      %v462 = vpack.c.b16 %v443, %v442
      %v463 = vpack.c.b16 %v445, %v444
      %v464 = vpack.c.b16 %v447, %v446
      %v465 = vpack.c.b16 %v449, %v448
      %482 = vmatprep.subr.bf16.mxu0 0
      %483 = vmatpush1.bf16.msra.mxu0 %v450
      %484 = vmatprep.subr.bf16.mxu0 0
      %485 = vmatpush1.bf16.msra.mxu0 %v451
      %486 = vmatprep.subr.bf16.mxu0 0
      %487 = vmatpush1.bf16.msra.mxu0 %v452
      %488 = vmatprep.subr.bf16.mxu0 0
      %489 = vmatpush1.bf16.msra.mxu0 %v453
      %490 = vmatprep.subr.bf16.mxu0 0
      %491 = vmatpush1.bf16.msra.mxu0 %v454
      %492 = vmatprep.subr.bf16.mxu0 0
      %493 = vmatpush1.bf16.msra.mxu0 %v455
      %494 = vmatprep.subr.bf16.mxu0 0
      %495 = vmatpush1.bf16.msra.mxu0 %v456
      %496 = vmatprep.subr.bf16.mxu0 0
      %497 = vmatpush1.bf16.msra.mxu0 %v457
      %498 = vmatprep.subr.bf16.mxu0 0
      %499 = vmatpush1.bf16.msra.mxu0 %v458
      %500 = vmatprep.subr.bf16.mxu0 0
      %501 = vmatpush1.bf16.msra.mxu0 %v459
      %502 = vmatprep.subr.bf16.mxu0 0
      %503 = vmatpush1.bf16.msra.mxu0 %v460
      %504 = vmatprep.subr.bf16.mxu0 0
      %505 = vmatpush1.bf16.msra.mxu0 %v461
      %506 = vmatprep.subr.bf16.mxu0 0
      %507 = vmatpush1.bf16.msra.mxu0 %v462
      %508 = vmatprep.subr.bf16.mxu0 0
      %509 = vmatpush1.bf16.msra.mxu0 %v463
      %510 = vmatprep.subr.bf16.mxu0 0
      %511 = vmatpush1.bf16.msra.mxu0 %v464
      %512 = vmatprep.subr.bf16.mxu0 0
      %513 = vmatpush1.bf16.msra.mxu0 %v465
      %514 = vmatprep.mubr.bf16.mxu0 %v213
      %515 = vmatmul.mubr.bf16.gmra.mrb[0].mxu0 %v212
      %v516 = vpop.f32.mrb[0].mxu0
      %v517 = vadd.f32 0.0, %v516
      %v518 = vpop.f32.mrb[0].mxu0
      %v519 = vpop.f32.mrb[0].mxu0
      %v520 = vadd.f32 0.0, %v519
      %v521 = vpop.f32.mrb[0].mxu0
      %522 = vdwg.mxu0
      %v523 = vmax.f32 %v347, %v517
      %v524 = vmax.f32 %v350, %v520
      %s525 = scalar_lea.vmem %s165, 256
      %v526 = vld [vmem:[%s525] sm:$0xf]
      %v527 = vld [vmem:[%s525 + $0x4] sm:$0xf]
      %v528 = vld [vmem:[%s525 + $0x8] sm:$0xf]
      %v529 = vld [vmem:[%s525 + $0xc] sm:$0xf]
      %v530 = vld [vmem:[%s525 + $0x10] sm:$0xf]
      %v531 = vld [vmem:[%s525 + $0x14] sm:$0xf]
      %v532 = vld [vmem:[%s525 + $0x18] sm:$0xf]
      %v533 = vld [vmem:[%s525 + $0x1c] sm:$0xf]
      %v534 = vld [vmem:[%s525 + $0x20] sm:$0xf]
      %v535 = vld [vmem:[%s525 + $0x24] sm:$0xf]
      %v536 = vld [vmem:[%s525 + $0x28] sm:$0xf]
      %v537 = vld [vmem:[%s525 + $0x2c] sm:$0xf]
      %v538 = vld [vmem:[%s525 + $0x30] sm:$0xf]
      %v539 = vld [vmem:[%s525 + $0x34] sm:$0xf]
      %v540 = vld [vmem:[%s525 + $0x38] sm:$0xf]
      %v541 = vld [vmem:[%s525 + $0x3c] sm:$0xf]
      %v542 = vld [vmem:[%s525 + $0x40] sm:$0xf]
      %v543 = vld [vmem:[%s525 + $0x44] sm:$0xf]
      %v544 = vld [vmem:[%s525 + $0x48] sm:$0xf]
      %v545 = vld [vmem:[%s525 + $0x4c] sm:$0xf]
      %v546 = vld [vmem:[%s525 + $0x50] sm:$0xf]
      %v547 = vld [vmem:[%s525 + $0x54] sm:$0xf]
      %v548 = vld [vmem:[%s525 + $0x58] sm:$0xf]
      %v549 = vld [vmem:[%s525 + $0x5c] sm:$0xf]
      %v550 = vld [vmem:[%s525 + $0x60] sm:$0xf]
      %v551 = vld [vmem:[%s525 + $0x64] sm:$0xf]
      %v552 = vld [vmem:[%s525 + $0x68] sm:$0xf]
      %v553 = vld [vmem:[%s525 + $0x6c] sm:$0xf]
      %v554 = vld [vmem:[%s525 + $0x70] sm:$0xf]
      %v555 = vld [vmem:[%s525 + $0x74] sm:$0xf]
      %v556 = vld [vmem:[%s525 + $0x78] sm:$0xf]
      %v557 = vld [vmem:[%s525 + $0x7c] sm:$0xf]
      %v590 = vunpack.c.l.b16 %v526
      %v591 = vunpack.c.l.b16 %v527
      %v592 = vunpack.c.l.b16 %v528
      %v593 = vunpack.c.l.b16 %v529
      %v594 = vunpack.c.l.b16 %v530
      %v595 = vunpack.c.l.b16 %v531
      %v596 = vunpack.c.l.b16 %v532
      %v597 = vunpack.c.l.b16 %v533
      %v598 = vunpack.c.l.b16 %v534
      %v599 = vunpack.c.l.b16 %v535
      %v600 = vunpack.c.l.b16 %v536
      %v601 = vunpack.c.l.b16 %v537
      %v602 = vunpack.c.l.b16 %v538
      %v603 = vunpack.c.l.b16 %v539
      %v604 = vunpack.c.l.b16 %v540
      %v605 = vunpack.c.l.b16 %v541
      %v606 = vunpack.c.l.b16 %v542
      %v607 = vunpack.c.l.b16 %v543
      %v608 = vunpack.c.l.b16 %v544
      %v609 = vunpack.c.l.b16 %v545
      %v610 = vunpack.c.l.b16 %v546
      %v611 = vunpack.c.l.b16 %v547
      %v612 = vunpack.c.l.b16 %v548
      %v613 = vunpack.c.l.b16 %v549
      %v614 = vunpack.c.l.b16 %v550
      %v615 = vunpack.c.l.b16 %v551
      %v616 = vunpack.c.l.b16 %v552
      %v617 = vunpack.c.l.b16 %v553
      %v618 = vunpack.c.l.b16 %v554
      %v619 = vunpack.c.l.b16 %v555
      %v620 = vunpack.c.l.b16 %v556
      %v621 = vunpack.c.l.b16 %v557
      %v622 = vpack.c.b16 %v591, %v590
      %v623 = vpack.c.b16 %v593, %v592
      %v624 = vpack.c.b16 %v595, %v594
      %v625 = vpack.c.b16 %v597, %v596
      %v626 = vpack.c.b16 %v599, %v598
      %v627 = vpack.c.b16 %v601, %v600
      %v628 = vpack.c.b16 %v603, %v602
      %v629 = vpack.c.b16 %v605, %v604
      %v630 = vpack.c.b16 %v607, %v606
      %v631 = vpack.c.b16 %v609, %v608
      %v632 = vpack.c.b16 %v611, %v610
      %v633 = vpack.c.b16 %v613, %v612
      %v634 = vpack.c.b16 %v615, %v614
      %v635 = vpack.c.b16 %v617, %v616
      %v636 = vpack.c.b16 %v619, %v618
      %v637 = vpack.c.b16 %v621, %v620
      %654 = vmatprep.subr.bf16.mxu0 0
      %655 = vmatpush1.bf16.msra.mxu0 %v622
      %656 = vmatprep.subr.bf16.mxu0 0
      %657 = vmatpush1.bf16.msra.mxu0 %v623
      %658 = vmatprep.subr.bf16.mxu0 0
      %659 = vmatpush1.bf16.msra.mxu0 %v624
      %660 = vmatprep.subr.bf16.mxu0 0
      %661 = vmatpush1.bf16.msra.mxu0 %v625
      %662 = vmatprep.subr.bf16.mxu0 0
      %663 = vmatpush1.bf16.msra.mxu0 %v626
      %664 = vmatprep.subr.bf16.mxu0 0
      %665 = vmatpush1.bf16.msra.mxu0 %v627
      %666 = vmatprep.subr.bf16.mxu0 0
      %667 = vmatpush1.bf16.msra.mxu0 %v628
      %668 = vmatprep.subr.bf16.mxu0 0
      %669 = vmatpush1.bf16.msra.mxu0 %v629
      %670 = vmatprep.subr.bf16.mxu0 0
      %671 = vmatpush1.bf16.msra.mxu0 %v630
      %672 = vmatprep.subr.bf16.mxu0 0
      %673 = vmatpush1.bf16.msra.mxu0 %v631
      %674 = vmatprep.subr.bf16.mxu0 0
      %675 = vmatpush1.bf16.msra.mxu0 %v632
      %676 = vmatprep.subr.bf16.mxu0 0
      %677 = vmatpush1.bf16.msra.mxu0 %v633
      %678 = vmatprep.subr.bf16.mxu0 0
      %679 = vmatpush1.bf16.msra.mxu0 %v634
      %680 = vmatprep.subr.bf16.mxu0 0
      %681 = vmatpush1.bf16.msra.mxu0 %v635
      %682 = vmatprep.subr.bf16.mxu0 0
      %683 = vmatpush1.bf16.msra.mxu0 %v636
      %684 = vmatprep.subr.bf16.mxu0 0
      %685 = vmatpush1.bf16.msra.mxu0 %v637
      %686 = vmatprep.mubr.bf16.mxu0 %v213
      %687 = vmatmul.mubr.bf16.gmra.mrb[0].mxu0 %v212
      %v688 = vpop.f32.mrb[0].mxu0
      %v689 = vadd.f32 0.0, %v688
      %v690 = vpop.f32.mrb[0].mxu0
      %v691 = vpop.f32.mrb[0].mxu0
      %v692 = vadd.f32 0.0, %v691
      %v693 = vpop.f32.mrb[0].mxu0
      %694 = vdwg.mxu0
      %v695 = vmax.f32 %v523, %v689
      %v696 = vmax.f32 %v524, %v692
      %s697 = scalar_lea.vmem %s165, 384
      %v698 = vld [vmem:[%s697] sm:$0xf]
      %v699 = vld [vmem:[%s697 + $0x4] sm:$0xf]
      %v700 = vld [vmem:[%s697 + $0x8] sm:$0xf]
      %v701 = vld [vmem:[%s697 + $0xc] sm:$0xf]
      %v702 = vld [vmem:[%s697 + $0x10] sm:$0xf]
      %v703 = vld [vmem:[%s697 + $0x14] sm:$0xf]
      %v704 = vld [vmem:[%s697 + $0x18] sm:$0xf]
      %v705 = vld [vmem:[%s697 + $0x1c] sm:$0xf]
      %v706 = vld [vmem:[%s697 + $0x20] sm:$0xf]
      %v707 = vld [vmem:[%s697 + $0x24] sm:$0xf]
      %v708 = vld [vmem:[%s697 + $0x28] sm:$0xf]
      %v709 = vld [vmem:[%s697 + $0x2c] sm:$0xf]
      %v710 = vld [vmem:[%s697 + $0x30] sm:$0xf]
      %v711 = vld [vmem:[%s697 + $0x34] sm:$0xf]
      %v712 = vld [vmem:[%s697 + $0x38] sm:$0xf]
      %v713 = vld [vmem:[%s697 + $0x3c] sm:$0xf]
      %v714 = vld [vmem:[%s697 + $0x40] sm:$0xf]
      %v715 = vld [vmem:[%s697 + $0x44] sm:$0xf]
      %v716 = vld [vmem:[%s697 + $0x48] sm:$0xf]
      %v717 = vld [vmem:[%s697 + $0x4c] sm:$0xf]
      %v718 = vld [vmem:[%s697 + $0x50] sm:$0xf]
      %v719 = vld [vmem:[%s697 + $0x54] sm:$0xf]
      %v720 = vld [vmem:[%s697 + $0x58] sm:$0xf]
      %v721 = vld [vmem:[%s697 + $0x5c] sm:$0xf]
      %v722 = vld [vmem:[%s697 + $0x60] sm:$0xf]
      %v723 = vld [vmem:[%s697 + $0x64] sm:$0xf]
      %v724 = vld [vmem:[%s697 + $0x68] sm:$0xf]
      %v725 = vld [vmem:[%s697 + $0x6c] sm:$0xf]
      %v726 = vld [vmem:[%s697 + $0x70] sm:$0xf]
      %v727 = vld [vmem:[%s697 + $0x74] sm:$0xf]
      %v728 = vld [vmem:[%s697 + $0x78] sm:$0xf]
      %v729 = vld [vmem:[%s697 + $0x7c] sm:$0xf]
      %v762 = vunpack.c.l.b16 %v698
      %v763 = vunpack.c.l.b16 %v699
      %v764 = vunpack.c.l.b16 %v700
      %v765 = vunpack.c.l.b16 %v701
      %v766 = vunpack.c.l.b16 %v702
      %v767 = vunpack.c.l.b16 %v703
      %v768 = vunpack.c.l.b16 %v704
      %v769 = vunpack.c.l.b16 %v705
      %v770 = vunpack.c.l.b16 %v706
      %v771 = vunpack.c.l.b16 %v707
      %v772 = vunpack.c.l.b16 %v708
      %v773 = vunpack.c.l.b16 %v709
      %v774 = vunpack.c.l.b16 %v710
      %v775 = vunpack.c.l.b16 %v711
      %v776 = vunpack.c.l.b16 %v712
      %v777 = vunpack.c.l.b16 %v713
      %v778 = vunpack.c.l.b16 %v714
      %v779 = vunpack.c.l.b16 %v715
      %v780 = vunpack.c.l.b16 %v716
      %v781 = vunpack.c.l.b16 %v717
      %v782 = vunpack.c.l.b16 %v718
      %v783 = vunpack.c.l.b16 %v719
      %v784 = vunpack.c.l.b16 %v720
      %v785 = vunpack.c.l.b16 %v721
      %v786 = vunpack.c.l.b16 %v722
      %v787 = vunpack.c.l.b16 %v723
      %v788 = vunpack.c.l.b16 %v724
      %v789 = vunpack.c.l.b16 %v725
      %v790 = vunpack.c.l.b16 %v726
      %v791 = vunpack.c.l.b16 %v727
      %v792 = vunpack.c.l.b16 %v728
      %v793 = vunpack.c.l.b16 %v729
      %v794 = vpack.c.b16 %v763, %v762
      %v795 = vpack.c.b16 %v765, %v764
      %v796 = vpack.c.b16 %v767, %v766
      %v797 = vpack.c.b16 %v769, %v768
      %v798 = vpack.c.b16 %v771, %v770
      %v799 = vpack.c.b16 %v773, %v772
      %v800 = vpack.c.b16 %v775, %v774
      %v801 = vpack.c.b16 %v777, %v776
      %v802 = vpack.c.b16 %v779, %v778
      %v803 = vpack.c.b16 %v781, %v780
      %v804 = vpack.c.b16 %v783, %v782
      %v805 = vpack.c.b16 %v785, %v784
      %v806 = vpack.c.b16 %v787, %v786
      %v807 = vpack.c.b16 %v789, %v788
      %v808 = vpack.c.b16 %v791, %v790
      %v809 = vpack.c.b16 %v793, %v792
      %826 = vmatprep.subr.bf16.mxu0 0
      %827 = vmatpush1.bf16.msra.mxu0 %v794
      %828 = vmatprep.subr.bf16.mxu0 0
      %829 = vmatpush1.bf16.msra.mxu0 %v795
      %830 = vmatprep.subr.bf16.mxu0 0
      %831 = vmatpush1.bf16.msra.mxu0 %v796
      %832 = vmatprep.subr.bf16.mxu0 0
      %833 = vmatpush1.bf16.msra.mxu0 %v797
      %834 = vmatprep.subr.bf16.mxu0 0
      %835 = vmatpush1.bf16.msra.mxu0 %v798
      %836 = vmatprep.subr.bf16.mxu0 0
      %837 = vmatpush1.bf16.msra.mxu0 %v799
      %838 = vmatprep.subr.bf16.mxu0 0
      %839 = vmatpush1.bf16.msra.mxu0 %v800
      %840 = vmatprep.subr.bf16.mxu0 0
      %841 = vmatpush1.bf16.msra.mxu0 %v801
      %842 = vmatprep.subr.bf16.mxu0 0
      %843 = vmatpush1.bf16.msra.mxu0 %v802
      %844 = vmatprep.subr.bf16.mxu0 0
      %845 = vmatpush1.bf16.msra.mxu0 %v803
      %846 = vmatprep.subr.bf16.mxu0 0
      %847 = vmatpush1.bf16.msra.mxu0 %v804
      %848 = vmatprep.subr.bf16.mxu0 0
      %849 = vmatpush1.bf16.msra.mxu0 %v805
      %850 = vmatprep.subr.bf16.mxu0 0
      %851 = vmatpush1.bf16.msra.mxu0 %v806
      %852 = vmatprep.subr.bf16.mxu0 0
      %853 = vmatpush1.bf16.msra.mxu0 %v807
      %854 = vmatprep.subr.bf16.mxu0 0
      %855 = vmatpush1.bf16.msra.mxu0 %v808
      %856 = vmatprep.subr.bf16.mxu0 0
      %857 = vmatpush1.bf16.msra.mxu0 %v809
      %858 = vmatprep.mubr.bf16.mxu0 %v213
      %859 = vmatmul.mubr.bf16.gmra.mrb[0].mxu0 %v212
      %v860 = vpop.f32.mrb[0].mxu0
      %v861 = vadd.f32 0.0, %v860
      %v862 = vpop.f32.mrb[0].mxu0
      %v863 = vpop.f32.mrb[0].mxu0
      %v864 = vadd.f32 0.0, %v863
      %v865 = vpop.f32.mrb[0].mxu0
      %866 = vdwg.mxu0
      %v867 = vmax.f32 %v695, %v861
      %v868 = vmax.f32 %v696, %v864
      %v869 = vld [vmem:[%s2] sm:$0xff]
      %v870 = vld [vmem:[%s2 + $0x8] sm:$0xff]
      %872 = vset.pattern.permute.xlu0 0
      %873 = vperm.xlu0 %872, %v869
      %v874 = vpop.permute.xlu0 %873
      %877 = vset.pattern.permute.xlu0 0
      %878 = vperm.xlu0 %877, %v870
      %v879 = vpop.permute.xlu0 %878
      %v881 = vadd.f32 %v867, %v874
      %v882 = vadd.f32 %v868, %v879
      %v883 = vmax.f32 %v881, 0.0
      %v884 = vmax.f32 %v882, 0.0
      %vm885 = vcmask 203776
      %886 = vst.msk [vmem:[%s170] sm:$0xff] %vm885, %v883
      %887 = vst.msk [vmem:[%s170 + $0x8] sm:$0xff] %vm885, %v884
      %p888 = scmp.lt.s32.totalorder %s14, 1
      %s889 = scalar_select %p888, %s14, 1
      %s890 = smul.addr %s889, 2
      %s891 = smul.addr %s890, 8
      %s892 = scalar_lea.vmem %s3, %s891
      // Predicated region
      $region33: #{cnn_forward.4} parent=31 // pred_check
        %p893 = pneg %p100
      $region34: #{cnn_forward.4} parent=31 // pred_check_branch
        %895 = sbr.rel (%p893) target = $region36
      $region35: #{cnn_forward.4} parent=31 // pred_region
        _
      $region36: #{cnn_forward.4} parent=31 // pred_fallthru
        _
    $region32: #{cnn_forward.4} parent=5 // pred_fallthru
      _
    %p896 = scmp.le.s32.totalorder 2, %s9
    // Predicated region
    $region37: #{cnn_forward.4} parent=5 // pred_check
      %p897 = pneg %p896
    $region38: #{cnn_forward.4} parent=5 // pred_check_branch
      %899 = sbr.rel (%p897) target = $region40
    $region39: #{cnn_forward.4} parent=5 // pred_region
      %s900 = ssub.s32 %s9, 2
      // Predicated region
      $region41: #{cnn_forward.4} parent=39 // pred_check
        %p901 = pneg %p106
      $region42: #{cnn_forward.4} parent=39 // pred_check_branch
        %903 = sbr.rel (%p901) target = $region44
      $region43: #{cnn_forward.4} parent=39 // pred_region
        %p904 = scmp.lt.s32.totalorder %s15, 1
        %s905 = scalar_select %p904, %s15, 1
        %s906 = smul.addr %s905, 2
        %s907 = smul.addr %s906, 8
        %s908 = scalar_lea.vmem %s3, %s907
      $region44: #{cnn_forward.4} parent=39 // pred_fallthru
        _
    $region40: #{cnn_forward.4} parent=5 // pred_fallthru
      _
  $region6: #{cnn_forward.4} parent=0 // loop_footer
    %s13 = sadd.s32 1, %s9
  $region7: #{cnn_forward.4} parent=0 // loop_footer_branch
    %8 = sbr.rel target = $region3
  $region8: #{cnn_forward.4} parent=0 // loop_exit
    _

// kernel: cnn_forward.5
$region0: #{cnn_forward.5}
  #allocation0 [shape = 'u32[]', space=smem, size = 0x4, offset = 0x4, fixed_abs, tag = 'smem constant byte address 0x4 - core index']
  #allocation1 [shape = 'u32[144,128]{1,0:T(1,128)}', space=vmem, size = 0x12000, scoped, tag = 'internal scratch']
  %s0 = inlined_call_operand.vmem [shape: bf16[2,400], index: 0, kind: input, shape index: {}]
  %s1 = inlined_call_operand.vmem [shape: bf16[400,120], index: 1, kind: input, shape index: {}]
  %s2 = inlined_call_operand.vmem [shape: f32[1,120], index: 2, kind: input, shape index: {}]
  %s3 = inlined_call_operand.vmem [shape: bf16[120,84], index: 3, kind: input, shape index: {}]
  %s4 = inlined_call_operand.vmem [shape: f32[1,84], index: 4, kind: input, shape index: {}]
  %s5 = inlined_call_operand.vmem [shape: bf16[84,10], index: 5, kind: input, shape index: {}]
  %s6 = inlined_call_operand.vmem [shape: f32[1,10], index: 6, kind: input, shape index: {}]
  %s7 = inlined_call_operand.hbm [shape: f32[2,10], index: 7, kind: output, shape index: {}]
  %s8 = sld [smem:[#allocation0]]
  $region38: #{cnn_forward.5} parent=0
    _
  %s10 = ssub.s32 1, %s8
  %s11 = scalar_select 0, %s10, %s8
  $region1: #{cnn_forward.5} parent=0
    #allocation2 [shape = 'u8[1024]{0}', space=vmem, size = 0x400, scoped, tag = 'output window, operand 0, single buffered']
    #allocation3 [shape = 's32[1]{0}', space=sflag, size = 0x4, scoped, tag = 'scoped memory for cnn_forward.5']
    %12 = vsyncpa [#allocation3], 0
    // Predicated region
    $region2: #{cnn_forward.5} parent=1 // pred_check
      _
    $region3: #{cnn_forward.5} parent=1 // pred_check_branch
      %14 = sbr.rel (0) target = $region5
    $region4: #{cnn_forward.5} parent=1 // pred_region
      _
    $region5: #{cnn_forward.5} parent=1 // pred_fallthru
      _
    // Predicated region
    $region6: #{cnn_forward.5} parent=1 // pred_check
      _
    $region7: #{cnn_forward.5} parent=1 // pred_check_branch
      %16 = sbr.rel (0) target = $region9
    $region8: #{cnn_forward.5} parent=1 // pred_region
      _
    $region9: #{cnn_forward.5} parent=1 // pred_fallthru
      _
    // Predicated region
    $region10: #{cnn_forward.5} parent=1 // pred_check
      _
    $region11: #{cnn_forward.5} parent=1 // pred_check_branch
      %18 = sbr.rel (0) target = $region13
    $region12: #{cnn_forward.5} parent=1 // pred_region
      _
    $region13: #{cnn_forward.5} parent=1 // pred_fallthru
      _
    // Predicated region
    $region14: #{cnn_forward.5} parent=1 // pred_check
      _
    $region15: #{cnn_forward.5} parent=1 // pred_check_branch
      %20 = sbr.rel (0) target = $region17
    $region16: #{cnn_forward.5} parent=1 // pred_region
      _
    $region17: #{cnn_forward.5} parent=1 // pred_fallthru
      _
    // Predicated region
    $region18: #{cnn_forward.5} parent=1 // pred_check
      _
    $region19: #{cnn_forward.5} parent=1 // pred_check_branch
      %22 = sbr.rel (0) target = $region21
    $region20: #{cnn_forward.5} parent=1 // pred_region
      _
    $region21: #{cnn_forward.5} parent=1 // pred_fallthru
      _
    // Predicated region
    $region22: #{cnn_forward.5} parent=1 // pred_check
      _
    $region23: #{cnn_forward.5} parent=1 // pred_check_branch
      %24 = sbr.rel (0) target = $region25
    $region24: #{cnn_forward.5} parent=1 // pred_region
      _
    $region25: #{cnn_forward.5} parent=1 // pred_fallthru
      _
    // Predicated region
    $region26: #{cnn_forward.5} parent=1 // pred_check
      _
    $region27: #{cnn_forward.5} parent=1 // pred_check_branch
      %26 = sbr.rel (0) target = $region29
    $region28: #{cnn_forward.5} parent=1 // pred_region
      _
    $region29: #{cnn_forward.5} parent=1 // pred_fallthru
      _
    %v28 = vld [vmem:[%s0] sm:$0xf]
    %v29 = vld [vmem:[%s1] sm:$0xf]
    %v30 = vld [vmem:[%s1 + $0x4] sm:$0xf]
    %v31 = vld [vmem:[%s1 + $0x8] sm:$0xf]
    %v32 = vld [vmem:[%s1 + $0xc] sm:$0xf]
    %v33 = vld [vmem:[%s1 + $0x10] sm:$0xf]
    %v34 = vld [vmem:[%s1 + $0x14] sm:$0xf]
    %v35 = vld [vmem:[%s1 + $0x18] sm:$0xf]
    %v36 = vld [vmem:[%s1 + $0x1c] sm:$0xf]
    %v37 = vld [vmem:[%s1 + $0x20] sm:$0xf]
    %v38 = vld [vmem:[%s1 + $0x24] sm:$0xf]
    %v39 = vld [vmem:[%s1 + $0x28] sm:$0xf]
    %v40 = vld [vmem:[%s1 + $0x2c] sm:$0xf]
    %v41 = vld [vmem:[%s1 + $0x30] sm:$0xf]
    %v42 = vld [vmem:[%s1 + $0x34] sm:$0xf]
    %v43 = vld [vmem:[%s1 + $0x38] sm:$0xf]
    %v44 = vld [vmem:[%s1 + $0x3c] sm:$0xf]
    %v45 = vld [vmem:[%s1 + $0x40] sm:$0xf]
    %v46 = vld [vmem:[%s1 + $0x44] sm:$0xf]
    %v47 = vld [vmem:[%s1 + $0x48] sm:$0xf]
    %v48 = vld [vmem:[%s1 + $0x4c] sm:$0xf]
    %v49 = vld [vmem:[%s1 + $0x50] sm:$0xf]
    %v50 = vld [vmem:[%s1 + $0x54] sm:$0xf]
    %v51 = vld [vmem:[%s1 + $0x58] sm:$0xf]
    %v52 = vld [vmem:[%s1 + $0x5c] sm:$0xf]
    %v53 = vld [vmem:[%s1 + $0x60] sm:$0xf]
    %v54 = vld [vmem:[%s1 + $0x64] sm:$0xf]
    %v55 = vld [vmem:[%s1 + $0x68] sm:$0xf]
    %v56 = vld [vmem:[%s1 + $0x6c] sm:$0xf]
    %v57 = vld [vmem:[%s1 + $0x70] sm:$0xf]
    %v58 = vld [vmem:[%s1 + $0x74] sm:$0xf]
    %v59 = vld [vmem:[%s1 + $0x78] sm:$0xf]
    %v60 = vld [vmem:[%s1 + $0x7c] sm:$0xf]
    %v61 = vld [vmem:[%s1 + $0x80] sm:$0xf]
    %v62 = vld [vmem:[%s1 + $0x84] sm:$0xf]
    %v63 = vld [vmem:[%s1 + $0x88] sm:$0xf]
    %v64 = vld [vmem:[%s1 + $0x8c] sm:$0xf]
    %v65 = vld [vmem:[%s1 + $0x90] sm:$0xf]
    %v66 = vld [vmem:[%s1 + $0x94] sm:$0xf]
    %v67 = vld [vmem:[%s1 + $0x98] sm:$0xf]
    %v68 = vld [vmem:[%s1 + $0x9c] sm:$0xf]
    %v69 = vld [vmem:[%s1 + $0xa0] sm:$0xf]
    %v70 = vld [vmem:[%s1 + $0xa4] sm:$0xf]
    %v71 = vld [vmem:[%s1 + $0xa8] sm:$0xf]
    %v72 = vld [vmem:[%s1 + $0xac] sm:$0xf]
    %v73 = vld [vmem:[%s1 + $0xb0] sm:$0xf]
    %v74 = vld [vmem:[%s1 + $0xb4] sm:$0xf]
    %v75 = vld [vmem:[%s1 + $0xb8] sm:$0xf]
    %v76 = vld [vmem:[%s1 + $0xbc] sm:$0xf]
    %v77 = vld [vmem:[%s1 + $0xc0] sm:$0xf]
    %v78 = vld [vmem:[%s1 + $0xc4] sm:$0xf]
    %v79 = vld [vmem:[%s2] sm:$0x1]
    %v81 = vlaneseq
    %v82 = vshrl.u32 %v81, 7
    %v83 = vsub.s32 0, %v82
    %v84 = vrot.slane %v79, %v83
    %v88 = vunpack.c.l.s4 1966171168
    %v89 = vunpack.c.0.s8 %v88
    %v90 = vlaneseq
    %v91 = vshrl.u32 %v90, 7
    %v92 = vsub.s32 %v89, %v91
    %v93 = vrot.slane %v28, %v92
    %v94 = vcombine.high %v93, %v93
    %v96 = vunpack.c.l.s4 1966171168
    %v97 = vunpack.c.0.s8 %v96
    %v98 = vlaneseq
    %v99 = vshrl.u32 %v98, 7
    %v100 = vsub.s32 %v97, %v99
    %v101 = vrot.slane %v93, %v100
    %v103 = vunpack.c.l.s4 1966171168
    %v104 = vunpack.c.0.s8 %v103
    %v105 = vlaneseq
    %v106 = vshrl.u32 %v105, 7
    %v107 = vsub.s32 %v104, %v106
    %v108 = vrot.slane %v94, %v107
    %v109 = vcombine.high %v101, %v101
    %v110 = vcombine.high %v108, %v108
    %v164 = vunpack.c.l.b16 %v29
    %v165 = vunpack.c.l.b16 %v30
    %v166 = vunpack.c.l.b16 %v31
    %v167 = vunpack.c.l.b16 %v32
    %v168 = vunpack.c.l.b16 %v33
    %v169 = vunpack.c.l.b16 %v34
    %v170 = vunpack.c.l.b16 %v35
    %v171 = vunpack.c.l.b16 %v36
    %v172 = vunpack.c.l.b16 %v37
    %v173 = vunpack.c.l.b16 %v38
    %v174 = vunpack.c.l.b16 %v39
    %v175 = vunpack.c.l.b16 %v40
    %v176 = vunpack.c.l.b16 %v41
    %v177 = vunpack.c.l.b16 %v42
    %v178 = vunpack.c.l.b16 %v43
    %v179 = vunpack.c.l.b16 %v44
    %v180 = vunpack.c.l.b16 %v45
    %v181 = vunpack.c.l.b16 %v46
    %v182 = vunpack.c.l.b16 %v47
    %v183 = vunpack.c.l.b16 %v48
    %v184 = vunpack.c.l.b16 %v49
    %v185 = vunpack.c.l.b16 %v50
    %v186 = vunpack.c.l.b16 %v51
    %v187 = vunpack.c.l.b16 %v52
    %v188 = vunpack.c.l.b16 %v53
    %v189 = vunpack.c.l.b16 %v54
    %v190 = vunpack.c.l.b16 %v55
    %v191 = vunpack.c.l.b16 %v56
    %v192 = vunpack.c.l.b16 %v57
    %v193 = vunpack.c.l.b16 %v58
    %v194 = vunpack.c.l.b16 %v59
    %v195 = vunpack.c.l.b16 %v60
    %v196 = vunpack.c.l.b16 %v61
    %v197 = vunpack.c.l.b16 %v62
    %v198 = vunpack.c.l.b16 %v63
    %v199 = vunpack.c.l.b16 %v64
    %v200 = vunpack.c.l.b16 %v65
    %v201 = vunpack.c.l.b16 %v66
    %v202 = vunpack.c.l.b16 %v67
    %v203 = vunpack.c.l.b16 %v68
    %v204 = vunpack.c.l.b16 %v69
    %v205 = vunpack.c.l.b16 %v70
    %v206 = vunpack.c.l.b16 %v71
    %v207 = vunpack.c.l.b16 %v72
    %v208 = vunpack.c.l.b16 %v73
    %v209 = vunpack.c.l.b16 %v74
    %v210 = vunpack.c.l.b16 %v75
    %v211 = vunpack.c.l.b16 %v76
    %v212 = vunpack.c.l.b16 %v77
    %v213 = vunpack.c.l.b16 %v78
    %v214 = vpack.c.b16 %v165, %v164
    %v215 = vpack.c.b16 %v167, %v166
    %v216 = vpack.c.b16 %v169, %v168
    %v217 = vpack.c.b16 %v171, %v170
    %v218 = vpack.c.b16 %v173, %v172
    %v219 = vpack.c.b16 %v175, %v174
    %v220 = vpack.c.b16 %v177, %v176
    %v221 = vpack.c.b16 %v179, %v178
    %v222 = vpack.c.b16 %v181, %v180
    %v223 = vpack.c.b16 %v183, %v182
    %v224 = vpack.c.b16 %v185, %v184
    %v225 = vpack.c.b16 %v187, %v186
    %v226 = vpack.c.b16 %v189, %v188
    %v227 = vpack.c.b16 %v191, %v190
    %v228 = vpack.c.b16 %v193, %v192
    %v229 = vpack.c.b16 %v195, %v194
    %v230 = vpack.c.b16 %v197, %v196
    %v231 = vpack.c.b16 %v199, %v198
    %v232 = vpack.c.b16 %v201, %v200
    %v233 = vpack.c.b16 %v203, %v202
    %v234 = vpack.c.b16 %v205, %v204
    %v235 = vpack.c.b16 %v207, %v206
    %v236 = vpack.c.b16 %v209, %v208
    %v237 = vpack.c.b16 %v211, %v210
    %v238 = vpack.c.b16 %v213, %v212
    %vm264 = vcmask 130048
    %v266 = vsel %vm264, %v110, 0
    %268 = vmatprep.subr.bf16.mxu0 0
    %269 = vmatpush1.bf16.msra.mxu0 %v214
    %270 = vmatprep.subr.bf16.mxu0 0
    %271 = vmatpush1.bf16.msra.mxu0 %v215
    %272 = vmatprep.subr.bf16.mxu0 0
    %273 = vmatpush1.bf16.msra.mxu0 %v216
    %274 = vmatprep.subr.bf16.mxu0 0
    %275 = vmatpush1.bf16.msra.mxu0 %v217
    %276 = vmatprep.subr.bf16.mxu0 0
    %277 = vmatpush1.bf16.msra.mxu0 %v218
    %278 = vmatprep.subr.bf16.mxu0 0
    %279 = vmatpush1.bf16.msra.mxu0 %v219
    %280 = vmatprep.subr.bf16.mxu0 0
    %281 = vmatpush1.bf16.msra.mxu0 %v220
    %282 = vmatprep.subr.bf16.mxu0 0
    %283 = vmatpush1.bf16.msra.mxu0 %v221
    %284 = vmatprep.subr.bf16.mxu0 0
    %285 = vmatpush1.bf16.msra.mxu0 %v222
    %286 = vmatprep.subr.bf16.mxu0 0
    %287 = vmatpush1.bf16.msra.mxu0 %v223
    %288 = vmatprep.subr.bf16.mxu0 0
    %289 = vmatpush1.bf16.msra.mxu0 %v224
    %290 = vmatprep.subr.bf16.mxu0 0
    %291 = vmatpush1.bf16.msra.mxu0 %v225
    %292 = vmatprep.subr.bf16.mxu0 0
    %293 = vmatpush1.bf16.msra.mxu0 %v226
    %294 = vmatprep.subr.bf16.mxu0 0
    %295 = vmatpush1.bf16.msra.mxu0 %v227
    %296 = vmatprep.subr.bf16.mxu0 0
    %297 = vmatpush1.bf16.msra.mxu0 %v228
    %298 = vmatprep.subr.bf16.mxu0 0
    %299 = vmatpush1.bf16.msra.mxu0 %v229
    %300 = vmatprep.mubr.bf16.mxu0 %v108
    %301 = vmatmul.mubr.bf16.gmra.mrb[0].mxu0 %v101
    %v302 = vpop.f32.mrb[0].mxu0
    %v303 = vadd.f32 %v84, %v302
    %v304 = vpop.f32.mrb[0].mxu0
    %v305 = vpop.f32.mrb[0].mxu0
    %v306 = vpop.f32.mrb[0].mxu0
    %307 = vdwg.mxu0
    %308 = vmatprep.subr.bf16.mxu0 0
    %309 = vmatpush1.bf16.msra.mxu0 %v230
    %310 = vmatprep.subr.bf16.mxu0 0
    %311 = vmatpush1.bf16.msra.mxu0 %v231
    %312 = vmatprep.subr.bf16.mxu0 0
    %313 = vmatpush1.bf16.msra.mxu0 %v232
    %314 = vmatprep.subr.bf16.mxu0 0
    %315 = vmatpush1.bf16.msra.mxu0 %v233
    %316 = vmatprep.subr.bf16.mxu0 0
    %317 = vmatpush1.bf16.msra.mxu0 %v234
    %318 = vmatprep.subr.bf16.mxu0 0
    %319 = vmatpush1.bf16.msra.mxu0 %v235
    %320 = vmatprep.subr.bf16.mxu0 0
    %321 = vmatpush1.bf16.msra.mxu0 %v236
    %322 = vmatprep.subr.bf16.mxu0 0
    %323 = vmatpush1.bf16.msra.mxu0 %v237
    %324 = vmatprep.subr.bf16.mxu0 0
    %325 = vmatpush1.bf16.msra.mxu0 %v238
    %326 = vmatprep.subr.bf16.mxu0 0
    %327 = vmatpush1.bf16.msra.mxu0 0
    %328 = vmatprep.subr.bf16.mxu0 0
    %329 = vmatpush1.bf16.msra.mxu0 0
    %330 = vmatprep.subr.bf16.mxu0 0
    %331 = vmatpush1.bf16.msra.mxu0 0
    %332 = vmatprep.subr.bf16.mxu0 0
    %333 = vmatpush1.bf16.msra.mxu0 0
    %334 = vmatprep.subr.bf16.mxu0 0
    %335 = vmatpush1.bf16.msra.mxu0 0
    %336 = vmatprep.subr.bf16.mxu0 0
    %337 = vmatpush1.bf16.msra.mxu0 0
    %338 = vmatprep.subr.bf16.mxu0 0
    %339 = vmatpush1.bf16.msra.mxu0 0
    %340 = vmatprep.mubr.bf16.mxu0 %v266
    %341 = vmatmul.mubr.bf16.gmra.mrb[0].mxu0 %v109
    %v342 = vpop.f32.mrb[0].mxu0
    %v343 = vadd.f32 %v303, %v342
    %v344 = vpop.f32.mrb[0].mxu0
    %v345 = vpop.f32.mrb[0].mxu0
    %v346 = vpop.f32.mrb[0].mxu0
    %347 = vdwg.mxu0
    %v348 = vmax.f32 %v343, 0.0
    %v349 = vpack.c.bf16 %v348, %v348
    %v350 = vld [vmem:[%s3] sm:$0xf]
    %v351 = vld [vmem:[%s3 + $0x4] sm:$0xf]
    %v352 = vld [vmem:[%s3 + $0x8] sm:$0xf]
    %v353 = vld [vmem:[%s3 + $0xc] sm:$0xf]
    %v354 = vld [vmem:[%s3 + $0x10] sm:$0xf]
    %v355 = vld [vmem:[%s3 + $0x14] sm:$0xf]
    %v356 = vld [vmem:[%s3 + $0x18] sm:$0xf]
    %v357 = vld [vmem:[%s3 + $0x1c] sm:$0xf]
    %v358 = vld [vmem:[%s3 + $0x20] sm:$0xf]
    %v359 = vld [vmem:[%s3 + $0x24] sm:$0xf]
    %v360 = vld [vmem:[%s3 + $0x28] sm:$0xf]
    %v361 = vld [vmem:[%s3 + $0x2c] sm:$0xf]
    %v362 = vld [vmem:[%s3 + $0x30] sm:$0xf]
    %v363 = vld [vmem:[%s3 + $0x34] sm:$0xf]
    %v364 = vld [vmem:[%s3 + $0x38] sm:$0xf]
    %v365 = vld [vmem:[%s4] sm:$0x1]
    %v367 = vlaneseq
    %v368 = vshrl.u32 %v367, 7
    %v369 = vsub.s32 0, %v368
    %v370 = vrot.slane %v365, %v369
    %v387 = vunpack.c.l.b16 %v350
    %v388 = vunpack.c.l.b16 %v351
    %v389 = vunpack.c.l.b16 %v352
    %v390 = vunpack.c.l.b16 %v353
    %v391 = vunpack.c.l.b16 %v354
    %v392 = vunpack.c.l.b16 %v355
    %v393 = vunpack.c.l.b16 %v356
    %v394 = vunpack.c.l.b16 %v357
    %v395 = vunpack.c.l.b16 %v358
    %v396 = vunpack.c.l.b16 %v359
    %v397 = vunpack.c.l.b16 %v360
    %v398 = vunpack.c.l.b16 %v361
    %v399 = vunpack.c.l.b16 %v362
    %v400 = vunpack.c.l.b16 %v363
    %v401 = vunpack.c.l.b16 %v364
    %v402 = vpack.c.b16 %v388, %v387
    %v403 = vpack.c.b16 %v390, %v389
    %v404 = vpack.c.b16 %v392, %v391
    %v405 = vpack.c.b16 %v394, %v393
    %v406 = vpack.c.b16 %v396, %v395
    %v407 = vpack.c.b16 %v398, %v397
    %v408 = vpack.c.b16 %v400, %v399
    %v409 = vpack.c.b16 %v401, %v401
    %vm417 = vcmask 982016
    %v419 = vsel %vm417, %v349, 0
    %vm421 = vcmask 1043456
    %v423 = vsel %vm421, %v409, 0
    %425 = vmatprep.subr.bf16.mxu0 0
    %426 = vmatpush1.bf16.msra.mxu0 %v402
    %427 = vmatprep.subr.bf16.mxu0 0
    %428 = vmatpush1.bf16.msra.mxu0 %v403
    %429 = vmatprep.subr.bf16.mxu0 0
    %430 = vmatpush1.bf16.msra.mxu0 %v404
    %431 = vmatprep.subr.bf16.mxu0 0
    %432 = vmatpush1.bf16.msra.mxu0 %v405
    %433 = vmatprep.subr.bf16.mxu0 0
    %434 = vmatpush1.bf16.msra.mxu0 %v406
    %435 = vmatprep.subr.bf16.mxu0 0
    %436 = vmatpush1.bf16.msra.mxu0 %v407
    %437 = vmatprep.subr.bf16.mxu0 0
    %438 = vmatpush1.bf16.msra.mxu0 %v408
    %439 = vmatprep.subr.bf16.mxu0 0
    %440 = vmatpush1.bf16.msra.mxu0 %v423
    %441 = vmatprep.subr.bf16.mxu0 0
    %442 = vmatpush1.bf16.msra.mxu0 0
    %443 = vmatprep.subr.bf16.mxu0 0
    %444 = vmatpush1.bf16.msra.mxu0 0
    %445 = vmatprep.subr.bf16.mxu0 0
    %446 = vmatpush1.bf16.msra.mxu0 0
    %447 = vmatprep.subr.bf16.mxu0 0
    %448 = vmatpush1.bf16.msra.mxu0 0
    %449 = vmatprep.subr.bf16.mxu0 0
    %450 = vmatpush1.bf16.msra.mxu0 0
    %451 = vmatprep.subr.bf16.mxu0 0
    %452 = vmatpush1.bf16.msra.mxu0 0
    %453 = vmatprep.subr.bf16.mxu0 0
    %454 = vmatpush1.bf16.msra.mxu0 0
    %455 = vmatprep.subr.bf16.mxu0 0
    %456 = vmatpush1.bf16.msra.mxu0 0
    %457 = vmatprep.mubr.bf16.mxu0 0
    %458 = vmatmul.mubr.bf16.gmra.mrb[0].mxu0 %v419
    %v459 = vpop.f32.mrb[0].mxu0
    %v460 = vadd.f32 %v370, %v459
    %v461 = vpop.f32.mrb[0].mxu0
    %v462 = vpop.f32.mrb[0].mxu0
    %v463 = vpop.f32.mrb[0].mxu0
    %464 = vdwg.mxu0
    %v465 = vmax.f32 %v460, 0.0
    %v466 = vpack.c.bf16 %v465, %v465
    %v467 = vld [vmem:[%s5] sm:$0xf]
    %v468 = vld [vmem:[%s5 + $0x4] sm:$0xf]
    %v469 = vld [vmem:[%s5 + $0x8] sm:$0xf]
    %v470 = vld [vmem:[%s5 + $0xc] sm:$0xf]
    %v471 = vld [vmem:[%s5 + $0x10] sm:$0xf]
    %v472 = vld [vmem:[%s5 + $0x14] sm:$0xf]
    %v473 = vld [vmem:[%s5 + $0x18] sm:$0xf]
    %v474 = vld [vmem:[%s5 + $0x1c] sm:$0xf]
    %v475 = vld [vmem:[%s5 + $0x20] sm:$0xf]
    %v476 = vld [vmem:[%s5 + $0x24] sm:$0xf]
    %v477 = vld [vmem:[%s5 + $0x28] sm:$0x3]
    %v478 = vld [vmem:[%s6] sm:$0x1]
    %v480 = vlaneseq
    %v481 = vshrl.u32 %v480, 7
    %v482 = vsub.s32 0, %v481
    %v483 = vrot.slane %v478, %v482
    %v496 = vunpack.c.l.b16 %v467
    %v497 = vunpack.c.l.b16 %v468
    %v498 = vunpack.c.l.b16 %v469
    %v499 = vunpack.c.l.b16 %v470
    %v500 = vunpack.c.l.b16 %v471
    %v501 = vunpack.c.l.b16 %v472
    %v502 = vunpack.c.l.b16 %v473
    %v503 = vunpack.c.l.b16 %v474
    %v504 = vunpack.c.l.b16 %v475
    %v505 = vunpack.c.l.b16 %v476
    %v506 = vunpack.c.l.b16 %v477
    %v507 = vpack.c.b16 %v497, %v496
    %v508 = vpack.c.b16 %v499, %v498
    %v509 = vpack.c.b16 %v501, %v500
    %v510 = vpack.c.b16 %v503, %v502
    %v511 = vpack.c.b16 %v505, %v504
    %v512 = vpack.c.b16 %v506, %v506
    %vm518 = vcmask 687104
    %v520 = vsel %vm518, %v466, 0
    %vm522 = vcmask 1041408
    %v524 = vsel %vm522, %v512, 0
    %526 = vmatprep.subr.bf16.mxu0 0
    %527 = vmatpush1.bf16.msra.mxu0 %v507
    %528 = vmatprep.subr.bf16.mxu0 0
    %529 = vmatpush1.bf16.msra.mxu0 %v508
    %530 = vmatprep.subr.bf16.mxu0 0
    %531 = vmatpush1.bf16.msra.mxu0 %v509
    %532 = vmatprep.subr.bf16.mxu0 0
    %533 = vmatpush1.bf16.msra.mxu0 %v510
    %534 = vmatprep.subr.bf16.mxu0 0
    %535 = vmatpush1.bf16.msra.mxu0 %v511
    %536 = vmatprep.subr.bf16.mxu0 0
    %537 = vmatpush1.bf16.msra.mxu0 %v524
    %538 = vmatprep.subr.bf16.mxu0 0
    %539 = vmatpush1.bf16.msra.mxu0 0
    %540 = vmatprep.subr.bf16.mxu0 0
    %541 = vmatpush1.bf16.msra.mxu0 0
    %542 = vmatprep.subr.bf16.mxu0 0
    %543 = vmatpush1.bf16.msra.mxu0 0
    %544 = vmatprep.subr.bf16.mxu0 0
    %545 = vmatpush1.bf16.msra.mxu0 0
    %546 = vmatprep.subr.bf16.mxu0 0
    %547 = vmatpush1.bf16.msra.mxu0 0
    %548 = vmatprep.subr.bf16.mxu0 0
    %549 = vmatpush1.bf16.msra.mxu0 0
    %550 = vmatprep.subr.bf16.mxu0 0
    %551 = vmatpush1.bf16.msra.mxu0 0
    %552 = vmatprep.subr.bf16.mxu0 0
    %553 = vmatpush1.bf16.msra.mxu0 0
    %554 = vmatprep.subr.bf16.mxu0 0
    %555 = vmatpush1.bf16.msra.mxu0 0
    %556 = vmatprep.subr.bf16.mxu0 0
    %557 = vmatpush1.bf16.msra.mxu0 0
    %558 = vmatprep.mubr.bf16.mxu0 0
    %559 = vmatmul.mubr.bf16.gmra.mrb[0].mxu0 %v520
    %v560 = vpop.f32.mrb[0].mxu0
    %v561 = vadd.f32 %v483, %v560
    %v562 = vpop.f32.mrb[0].mxu0
    %v563 = vpop.f32.mrb[0].mxu0
    %v564 = vpop.f32.mrb[0].mxu0
    %565 = vdwg.mxu0
    %vm566 = vcmask 74752
    %567 = vst.msk [vmem:[#allocation2] sm:$0x3] %vm566, %v561
    // Predicated region
    $region30: #{cnn_forward.5} parent=1 // pred_check
      _
    $region31: #{cnn_forward.5} parent=1 // pred_check_branch
      %569 = sbr.rel (0) target = $region33
    $region32: #{cnn_forward.5} parent=1 // pred_region
      %s571 = ssub.s32 32, 32
      %572 = vsyncadd [#allocation3], %s571
      %s574 = sshll.u32 [#allocation2], 4
      %s575 = int_to_ptr.vmem [resolvable:$true] %s574
      %577 = dma.vmem_to_hbm [thread:$0]  %s575, 32, %s7, [#allocation3]
    $region33: #{cnn_forward.5} parent=1 // pred_fallthru
      _
    // Predicated region
    $region34: #{cnn_forward.5} parent=1 // pred_check
      _
    $region35: #{cnn_forward.5} parent=1 // pred_check_branch
      %579 = sbr.rel (0) target = $region37
    $region36: #{cnn_forward.5} parent=1 // pred_region
      %580 = dma.done [#allocation3], 32
    $region37: #{cnn_forward.5} parent=1 // pred_fallthru
      _
    %581 = vsyncpa [#allocation3], 1

</llo_original>
